<compile_context>
chip_gen: v7x
topology: tpu7x:2x2x1
jax: 0.10.0
libtpu: 0.0.40
codegen_flags: <defaults>
</compile_context>

<pallas_src>
import functools

import jax
import jax.numpy as jnp
from jax.experimental import pallas as pl
from jax.experimental.pallas import tpu as pltpu

_LANE = 128
_SUBLANE = 8


def _silu(x):
    return x * jax.nn.sigmoid(x)


def _round_up(x, m):
    return ((x + m - 1) // m) * m


def _pad2d(x, rows, cols):
    return jnp.pad(x, ((0, rows - x.shape[0]), (0, cols - x.shape[1])))


def mpnn_kernel(nodes_ref, edges_ref, oh_sum_ref, oh_nb_ref, oh_ct_ref,
                w1_ref, b1_ref, w2_ref, b2_ref, wt_ref, bt_ref,
                gamma_ref, beta_ref, out_ref, *, num_layers, e_real, unroll):
    """All MPNN layers fused: LayerNorm -> gather -> phi MLP -> scatter-add
    -> theta MLP -> residual, looped num_layers times with everything
    (weights, edges, one-hots, node state) resident in VMEM."""
    edges = edges_ref[...]                       # [Mp, Ep]
    oh_sum = oh_sum_ref[...]                     # [Mp, Np] center-oh + neighbor-oh
    oh_nb = oh_nb_ref[...]                       # [Mp, Np] neighbor one-hot
    oh_ct = oh_ct_ref[...]                       # [Np, Mp] pre-transposed center one-hot
    w1, w2, wt = w1_ref[...], w2_ref[...], wt_ref[...]

    mp, ep = edges.shape
    np_ = oh_ct.shape[0]
    hp = w1.shape[1]

    # ---- Loop-invariant broadcasts, hoisted (JAX doesn't CSE broadcast_in_dim) ----
    b1 = jnp.broadcast_to(b1_ref[...], (mp, hp))
    b2 = jnp.broadcast_to(b2_ref[...], (mp, ep))
    bt = jnp.broadcast_to(bt_ref[...], (np_, ep))
    gamma = jnp.broadcast_to(gamma_ref[...], (np_, ep))
    beta = jnp.broadcast_to(beta_ref[...], (np_, ep))
    inv_e = jnp.float32(1.0 / e_real)
    # Lane mask over the real E lanes (padded lanes of x are zero; the mask
    # keeps the two-pass variance exact despite lane padding).
    lane_mask = (jax.lax.broadcasted_iota(jnp.int32, (1, ep), 1) < e_real
                 ).astype(jnp.float32)
    lane_mask = jnp.broadcast_to(lane_mask, (np_, ep))

    def one_layer(_, x):
        # ---- LayerNorm, two-pass variance over the real E lanes ----
        mean = jnp.sum(x, axis=-1, keepdims=True) * inv_e
        d = (x - mean) * lane_mask
        var = jnp.sum(d * d, axis=-1, keepdims=True) * inv_e
        # gamma/beta are zero in padded lanes, so padded lanes of xn stay 0.
        xn = d * jax.lax.rsqrt(var + 1e-5) * gamma + beta                # [Np, Ep]

        # ---- Gathers: two straight MXU matmuls, no [2M, Ep] intermediate ----
        cn_sum = jnp.dot(oh_sum, xn, preferred_element_type=jnp.float32)   # center+neighbor
        neighbor = jnp.dot(oh_nb, xn, preferred_element_type=jnp.float32)  # neighbor

        # ---- phi MLP on edge messages: SiLU -> Linear(E,H) -> SiLU -> Linear(H,E) ----
        h = _silu(edges + cn_sum)
        h = _silu(jnp.dot(h, w1, preferred_element_type=jnp.float32) + b1)
        theta_edge = jnp.dot(h, w2, preferred_element_type=jnp.float32) + b2

        # ---- index_add_ over center index: straight matmul with the
        #      pre-transposed, layer-invariant one-hot (no in-loop transpose) ----
        msg = neighbor * theta_edge
        agg = jnp.dot(oh_ct, msg, preferred_element_type=jnp.float32)   # [Np, Ep]

        # ---- theta MLP (SiLU -> Linear(E,E)) + residual ----
        y = jnp.dot(_silu(xn + agg), wt, preferred_element_type=jnp.float32) + bt
        return x + y

    x = jax.lax.fori_loop(0, num_layers, one_layer, nodes_ref[...], unroll=unroll)
    out_ref[...] = x


@functools.partial(jax.jit, static_argnames=("num_layers",))
def mpnn_forward(nodes, edges, edge_index, params, num_layers):
    N, E = nodes.shape
    M = edges.shape[0]
    H = params["w1"].shape[1]
    Ep = _round_up(E, _LANE)
    Hp = _round_up(H, _LANE)
    Np = _round_up(N, _SUBLANE)
    Mp = _round_up(M, _SUBLANE)

    # ---- Layer-invariant one-hot operands, built ONCE in the wrapper ----
    # Padded edge slots get id -1 so their one-hot rows are all-zero (no
    # contribution to either the gather or the scatter-add).
    ids = jnp.arange(Np, dtype=jnp.int32)[None, :]
    center = jnp.pad(edge_index[0].astype(jnp.int32), (0, Mp - M), constant_values=-1)
    neigh = jnp.pad(edge_index[1].astype(jnp.int32), (0, Mp - M), constant_values=-1)
    oh_c = (center[:, None] == ids).astype(jnp.float32)       # [Mp, Np]
    oh_n = (neigh[:, None] == ids).astype(jnp.float32)        # [Mp, Np]
    oh_sum = oh_c + oh_n                                      # one matmul -> center+neighbor
    oh_ct = oh_c.T                                            # [Np, Mp] scatter operand

    # ---- Zero-pad lane dims to 128 and row dims to 8 ----
    # (zero padding of gamma/beta/bias/weight columns keeps padded lanes == 0)
    nodes_p = _pad2d(nodes, Np, Ep)
    edges_p = _pad2d(edges, Mp, Ep)
    w1p, b1p = _pad2d(params["w1"], Ep, Hp), _pad2d(params["b1"], 1, Hp)
    w2p, b2p = _pad2d(params["w2"], Hp, Ep), _pad2d(params["b2"], 1, Ep)
    wtp, btp = _pad2d(params["wt"], Ep, Ep), _pad2d(params["bt"], 1, Ep)
    gp, bp = _pad2d(params["gamma"], 1, Ep), _pad2d(params["beta"], 1, Ep)

    operands = (nodes_p, edges_p, oh_sum, oh_n, oh_ct,
                w1p, b1p, w2p, b2p, wtp, btp, gp, bp)

    # Explicit scoped-VMEM budget: resident operands + output, 2x headroom.
    # (Defaults are 16 MiB on v5e / 32 MiB on v6e/v7x; physical ceiling is
    #  128 MiB on v5e/v6e and 64 MiB per TC on v7x.)
    resident_bytes = sum(int(a.size) * a.dtype.itemsize for a in operands)
    resident_bytes += Np * Ep * 4                              # output buffer
    vmem_limit = int(min(max(2 * resident_bytes + (1 << 20), 16 << 20), 100 << 20))

    kernel = functools.partial(mpnn_kernel, num_layers=num_layers, e_real=E,
                               unroll=(num_layers <= 4))
    vmem = pl.BlockSpec(memory_space=pltpu.MemorySpace.VMEM)
    out = pl.pallas_call(
        kernel,
        out_shape=jax.ShapeDtypeStruct((Np, Ep), jnp.float32),
        in_specs=[vmem] * len(operands),
        out_specs=vmem,
        input_output_aliases={0: 0},              # nodes buffer aliases the output
        compiler_params=pltpu.CompilerParams(vmem_limit_bytes=vmem_limit),
    )(*operands)
    return out[:N, :E]


# ---------------- pure-JAX reference (for sanity check) ----------------
def _mpblock_ref(nodes, edges, edge_index, p):
    mean = jnp.mean(nodes, axis=-1, keepdims=True)
    var = jnp.mean((nodes - mean) ** 2, axis=-1, keepdims=True)
    xn = (nodes - mean) / jnp.sqrt(var + 1e-5) * p["gamma"][0] + p["beta"][0]
    c, n = edge_index[0], edge_index[1]
    ce, ne = xn[c], xn[n]
    h = _silu(edges + ce + ne)
    h = _silu(h @ p["w1"] + p["b1"][0])
    te = h @ p["w2"] + p["b2"][0]
    msg = ne * te
    agg = jnp.zeros_like(xn).at[c].add(msg)
    return _silu(xn + agg) @ p["wt"] + p["bt"][0]


def _mpnn_ref(nodes, edges, edge_index, p, num_layers):
    for _ in range(num_layers):
        nodes = _mpblock_ref(nodes, edges, edge_index, p) + nodes
    return nodes


if __name__ == "__main__":
    # Small synthetic graph consistent with MPNN(num_mpnn_layers=2, embed_dim=32, hidden_dim=64)
    NUM_LAYERS, E, H = 2, 32, 64
    N_NODES, N_EDGES = 16, 48

    key = jax.random.PRNGKey(0)
    k = jax.random.split(key, 9)

    nodes = jax.random.normal(k[0], (N_NODES, E), dtype=jnp.float32)
    edges = jax.random.normal(k[1], (N_EDGES, E), dtype=jnp.float32)
    edge_index = jax.random.randint(k[2], (2, N_EDGES), 0, N_NODES, dtype=jnp.int32)

    def linear_init(wkey, bkey, fan_in, fan_out):
        bound = 1.0 / jnp.sqrt(jnp.float32(fan_in))
        w = jax.random.uniform(wkey, (fan_in, fan_out), jnp.float32, -bound, bound)
        b = jax.random.uniform(bkey, (1, fan_out), jnp.float32, -bound, bound)
        return w, b

    w1, b1 = linear_init(k[3], k[4], E, H)      # phi: Linear(E, H)
    w2, b2 = linear_init(k[5], k[6], H, E)      # phi: Linear(H, E)
    wt, bt = linear_init(k[7], k[8], E, E)      # theta: Linear(E, E)
    params = {
        "w1": w1, "b1": b1, "w2": w2, "b2": b2, "wt": wt, "bt": bt,
        "gamma": jnp.ones((1, E), jnp.float32),   # LayerNorm affine (torch default)
        "beta": jnp.zeros((1, E), jnp.float32),
    }
    # TODO(synk): torch's manual_seed(10)-reproduced weight values are not replicated;
    # deterministic JAX init is used instead (all layers still share one weight set).

    out = mpnn_forward(nodes, edges, edge_index, params, NUM_LAYERS)
    out = jax.block_until_ready(out)

    ref = _mpnn_ref(nodes, edges, edge_index, params, NUM_LAYERS)
    assert out.shape == (N_NODES, E)
    assert jnp.allclose(out, ref, atol=1e-3, rtol=1e-3), "mismatch vs pure-JAX reference"

    print("KERNEL_OK")
</pallas_src>

<mosaic_0001>
module attributes {stable_mosaic.version = 11 : i64} {
  func.func @mpnn_kernel(%arg0: memref<16x128xf32, #tpu.memory_space<vmem>>, %arg1: memref<48x128xf32, #tpu.memory_space<vmem>>, %arg2: memref<48x16xf32, #tpu.memory_space<vmem>>, %arg3: memref<48x16xf32, #tpu.memory_space<vmem>>, %arg4: memref<16x48xf32, #tpu.memory_space<vmem>>, %arg5: memref<128x128xf32, #tpu.memory_space<vmem>>, %arg6: memref<1x128xf32, #tpu.memory_space<vmem>>, %arg7: memref<128x128xf32, #tpu.memory_space<vmem>>, %arg8: memref<1x128xf32, #tpu.memory_space<vmem>>, %arg9: memref<128x128xf32, #tpu.memory_space<vmem>>, %arg10: memref<1x128xf32, #tpu.memory_space<vmem>>, %arg11: memref<1x128xf32, #tpu.memory_space<vmem>>, %arg12: memref<1x128xf32, #tpu.memory_space<vmem>>, %arg13: memref<16x128xf32, #tpu.memory_space<vmem>>) attributes {dimension_semantics = [], scalar_prefetch = 0 : i64, scratch_operands = 0 : i64, tpu.core_type = #tpu.core_type<tc>} {
    %c0 = arith.constant 0 : index
    %c0_0 = arith.constant 0 : index
    %0 = vector.load %arg1[%c0, %c0_0] : memref<48x128xf32, #tpu.memory_space<vmem>>, vector<48x128xf32>
    %c0_1 = arith.constant 0 : index
    %c0_2 = arith.constant 0 : index
    %1 = vector.load %arg2[%c0_1, %c0_2] : memref<48x16xf32, #tpu.memory_space<vmem>>, vector<48x16xf32>
    %c0_3 = arith.constant 0 : index
    %c0_4 = arith.constant 0 : index
    %2 = vector.load %arg3[%c0_3, %c0_4] : memref<48x16xf32, #tpu.memory_space<vmem>>, vector<48x16xf32>
    %c0_5 = arith.constant 0 : index
    %c0_6 = arith.constant 0 : index
    %3 = vector.load %arg4[%c0_5, %c0_6] : memref<16x48xf32, #tpu.memory_space<vmem>>, vector<16x48xf32>
    %c0_7 = arith.constant 0 : index
    %c0_8 = arith.constant 0 : index
    %4 = vector.load %arg5[%c0_7, %c0_8] : memref<128x128xf32, #tpu.memory_space<vmem>>, vector<128x128xf32>
    %c0_9 = arith.constant 0 : index
    %c0_10 = arith.constant 0 : index
    %5 = vector.load %arg7[%c0_9, %c0_10] : memref<128x128xf32, #tpu.memory_space<vmem>>, vector<128x128xf32>
    %c0_11 = arith.constant 0 : index
    %c0_12 = arith.constant 0 : index
    %6 = vector.load %arg9[%c0_11, %c0_12] : memref<128x128xf32, #tpu.memory_space<vmem>>, vector<128x128xf32>
    %c0_13 = arith.constant 0 : index
    %c0_14 = arith.constant 0 : index
    %7 = vector.load %arg6[%c0_13, %c0_14] : memref<1x128xf32, #tpu.memory_space<vmem>>, vector<1x128xf32>
    %8 = vector.shape_cast %7 : vector<1x128xf32> to vector<1x128xf32>
    %9 = vector.broadcast %8 : vector<1x128xf32> to vector<48x128xf32>
    %c0_15 = arith.constant 0 : index
    %c0_16 = arith.constant 0 : index
    %10 = vector.load %arg8[%c0_15, %c0_16] : memref<1x128xf32, #tpu.memory_space<vmem>>, vector<1x128xf32>
    %11 = vector.shape_cast %10 : vector<1x128xf32> to vector<1x128xf32>
    %12 = vector.broadcast %11 : vector<1x128xf32> to vector<48x128xf32>
    %c0_17 = arith.constant 0 : index
    %c0_18 = arith.constant 0 : index
    %13 = vector.load %arg10[%c0_17, %c0_18] : memref<1x128xf32, #tpu.memory_space<vmem>>, vector<1x128xf32>
    %14 = vector.shape_cast %13 : vector<1x128xf32> to vector<1x128xf32>
    %15 = vector.broadcast %14 : vector<1x128xf32> to vector<16x128xf32>
    %c0_19 = arith.constant 0 : index
    %c0_20 = arith.constant 0 : index
    %16 = vector.load %arg11[%c0_19, %c0_20] : memref<1x128xf32, #tpu.memory_space<vmem>>, vector<1x128xf32>
    %17 = vector.shape_cast %16 : vector<1x128xf32> to vector<1x128xf32>
    %18 = vector.broadcast %17 : vector<1x128xf32> to vector<16x128xf32>
    %c0_21 = arith.constant 0 : index
    %c0_22 = arith.constant 0 : index
    %19 = vector.load %arg12[%c0_21, %c0_22] : memref<1x128xf32, #tpu.memory_space<vmem>>, vector<1x128xf32>
    %20 = vector.shape_cast %19 : vector<1x128xf32> to vector<1x128xf32>
    %21 = vector.broadcast %20 : vector<1x128xf32> to vector<16x128xf32>
    %22 = tpu.iota {dimensions = array<i32: 1>} : vector<1x128xi32>
    %c32_i32 = arith.constant 32 : i32
    %23 = vector.broadcast %c32_i32 : i32 to vector<1x128xi32>
    %24 = arith.cmpi slt, %22, %23 : vector<1x128xi32>
    %25 = arith.extui %24 : vector<1x128xi1> to vector<1x128xi32>
    %26 = arith.sitofp %25 : vector<1x128xi32> to vector<1x128xf32>
    %27 = vector.shape_cast %26 : vector<1x128xf32> to vector<1x128xf32>
    %28 = vector.broadcast %27 : vector<1x128xf32> to vector<16x128xf32>
    %c0_23 = arith.constant 0 : index
    %c0_24 = arith.constant 0 : index
    %29 = vector.load %arg0[%c0_23, %c0_24] : memref<16x128xf32, #tpu.memory_space<vmem>>, vector<16x128xf32>
    %cst = arith.constant 3.125000e-02 : f32
    %c0_i32 = arith.constant 0 : i32
    %cst_25 = arith.constant dense<0.000000e+00> : vector<16xf32>
    %30 = vector.multi_reduction <add>, %29, %cst_25 [1] : vector<16x128xf32> to vector<16xf32>
    %31 = vector.shape_cast %30 : vector<16xf32> to vector<16x1xf32>
    %32 = vector.broadcast %cst : f32 to vector<16x1xf32>
    %33 = arith.mulf %31, %32 : vector<16x1xf32>
    %34 = vector.broadcast %33 : vector<16x1xf32> to vector<16x128xf32>
    %35 = arith.subf %29, %34 : vector<16x128xf32>
    %36 = arith.mulf %35, %28 : vector<16x128xf32>
    %37 = arith.mulf %36, %36 : vector<16x128xf32>
    %cst_26 = arith.constant dense<0.000000e+00> : vector<16xf32>
    %38 = vector.multi_reduction <add>, %37, %cst_26 [1] : vector<16x128xf32> to vector<16xf32>
    %39 = vector.shape_cast %38 : vector<16xf32> to vector<16x1xf32>
    %40 = vector.broadcast %cst : f32 to vector<16x1xf32>
    %41 = arith.mulf %39, %40 : vector<16x1xf32>
    %cst_27 = arith.constant 9.99999974E-6 : f32
    %42 = vector.broadcast %cst_27 : f32 to vector<16x1xf32>
    %43 = arith.addf %41, %42 : vector<16x1xf32>
    %44 = math.rsqrt %43 : vector<16x1xf32>
    %45 = vector.broadcast %44 : vector<16x1xf32> to vector<16x128xf32>
    %46 = arith.mulf %36, %45 : vector<16x128xf32>
    %47 = arith.mulf %46, %18 : vector<16x128xf32>
    %48 = arith.addf %47, %21 : vector<16x128xf32>
    %cst_28 = arith.constant dense<0.000000e+00> : vector<48x128xf32>
    %49 = tpu.matmul %1, %48, %cst_28 {dimension_numbers = #tpu.dot_dimension_numbers<[1], [0], [0], [1], [0, 0, 1, 1], [], []>} : vector<48x16xf32>, vector<16x128xf32>, vector<48x128xf32> -> vector<48x128xf32>
    %cst_29 = arith.constant dense<0.000000e+00> : vector<48x128xf32>
    %50 = tpu.matmul %2, %48, %cst_29 {dimension_numbers = #tpu.dot_dimension_numbers<[1], [0], [0], [1], [0, 0, 1, 1], [], []>} : vector<48x16xf32>, vector<16x128xf32>, vector<48x128xf32> -> vector<48x128xf32>
    %51 = arith.addf %0, %49 : vector<48x128xf32>
    %52 = arith.negf %51 : vector<48x128xf32>
    %53 = math.exp %52 : vector<48x128xf32>
    %cst_30 = arith.constant 1.000000e+00 : f32
    %54 = vector.broadcast %cst_30 : f32 to vector<48x128xf32>
    %55 = arith.addf %54, %53 : vector<48x128xf32>
    %56 = arith.divf %54, %55 : vector<48x128xf32>
    %57 = arith.mulf %51, %56 : vector<48x128xf32>
    %cst_31 = arith.constant dense<0.000000e+00> : vector<48x128xf32>
    %58 = tpu.matmul %57, %4, %cst_31 {dimension_numbers = #tpu.dot_dimension_numbers<[1], [0], [0], [1], [0, 0, 1, 1], [], []>} : vector<48x128xf32>, vector<128x128xf32>, vector<48x128xf32> -> vector<48x128xf32>
    %59 = arith.addf %58, %9 : vector<48x128xf32>
    %60 = arith.negf %59 : vector<48x128xf32>
    %61 = math.exp %60 : vector<48x128xf32>
    %cst_32 = arith.constant 1.000000e+00 : f32
    %62 = vector.broadcast %cst_32 : f32 to vector<48x128xf32>
    %63 = arith.addf %62, %61 : vector<48x128xf32>
    %64 = arith.divf %62, %63 : vector<48x128xf32>
    %65 = arith.mulf %59, %64 : vector<48x128xf32>
    %cst_33 = arith.constant dense<0.000000e+00> : vector<48x128xf32>
    %66 = tpu.matmul %65, %5, %cst_33 {dimension_numbers = #tpu.dot_dimension_numbers<[1], [0], [0], [1], [0, 0, 1, 1], [], []>} : vector<48x128xf32>, vector<128x128xf32>, vector<48x128xf32> -> vector<48x128xf32>
    %67 = arith.addf %66, %12 : vector<48x128xf32>
    %68 = arith.mulf %50, %67 : vector<48x128xf32>
    %cst_34 = arith.constant dense<0.000000e+00> : vector<16x128xf32>
    %69 = tpu.matmul %3, %68, %cst_34 {dimension_numbers = #tpu.dot_dimension_numbers<[1], [0], [0], [1], [0, 0, 1, 1], [], []>} : vector<16x48xf32>, vector<48x128xf32>, vector<16x128xf32> -> vector<16x128xf32>
    %70 = arith.addf %48, %69 : vector<16x128xf32>
    %71 = arith.negf %70 : vector<16x128xf32>
    %72 = math.exp %71 : vector<16x128xf32>
    %cst_35 = arith.constant 1.000000e+00 : f32
    %73 = vector.broadcast %cst_35 : f32 to vector<16x128xf32>
    %74 = arith.addf %73, %72 : vector<16x128xf32>
    %75 = arith.divf %73, %74 : vector<16x128xf32>
    %76 = arith.mulf %70, %75 : vector<16x128xf32>
    %cst_36 = arith.constant dense<0.000000e+00> : vector<16x128xf32>
    %77 = tpu.matmul %76, %6, %cst_36 {dimension_numbers = #tpu.dot_dimension_numbers<[1], [0], [0], [1], [0, 0, 1, 1], [], []>} : vector<16x128xf32>, vector<128x128xf32>, vector<16x128xf32> -> vector<16x128xf32>
    %78 = arith.addf %77, %15 : vector<16x128xf32>
    %79 = arith.addf %29, %78 : vector<16x128xf32>
    %c1_i32 = arith.constant 1 : i32
    %cst_37 = arith.constant dense<0.000000e+00> : vector<16xf32>
    %80 = vector.multi_reduction <add>, %79, %cst_37 [1] : vector<16x128xf32> to vector<16xf32>
    %81 = vector.shape_cast %80 : vector<16xf32> to vector<16x1xf32>
    %82 = vector.broadcast %cst : f32 to vector<16x1xf32>
    %83 = arith.mulf %81, %82 : vector<16x1xf32>
    %84 = vector.broadcast %83 : vector<16x1xf32> to vector<16x128xf32>
    %85 = arith.subf %79, %84 : vector<16x128xf32>
    %86 = arith.mulf %85, %28 : vector<16x128xf32>
    %87 = arith.mulf %86, %86 : vector<16x128xf32>
    %cst_38 = arith.constant dense<0.000000e+00> : vector<16xf32>
    %88 = vector.multi_reduction <add>, %87, %cst_38 [1] : vector<16x128xf32> to vector<16xf32>
    %89 = vector.shape_cast %88 : vector<16xf32> to vector<16x1xf32>
    %90 = vector.broadcast %cst : f32 to vector<16x1xf32>
    %91 = arith.mulf %89, %90 : vector<16x1xf32>
    %cst_39 = arith.constant 9.99999974E-6 : f32
    %92 = vector.broadcast %cst_39 : f32 to vector<16x1xf32>
    %93 = arith.addf %91, %92 : vector<16x1xf32>
    %94 = math.rsqrt %93 : vector<16x1xf32>
    %95 = vector.broadcast %94 : vector<16x1xf32> to vector<16x128xf32>
    %96 = arith.mulf %86, %95 : vector<16x128xf32>
    %97 = arith.mulf %96, %18 : vector<16x128xf32>
    %98 = arith.addf %97, %21 : vector<16x128xf32>
    %cst_40 = arith.constant dense<0.000000e+00> : vector<48x128xf32>
    %99 = tpu.matmul %1, %98, %cst_40 {dimension_numbers = #tpu.dot_dimension_numbers<[1], [0], [0], [1], [0, 0, 1, 1], [], []>} : vector<48x16xf32>, vector<16x128xf32>, vector<48x128xf32> -> vector<48x128xf32>
    %cst_41 = arith.constant dense<0.000000e+00> : vector<48x128xf32>
    %100 = tpu.matmul %2, %98, %cst_41 {dimension_numbers = #tpu.dot_dimension_numbers<[1], [0], [0], [1], [0, 0, 1, 1], [], []>} : vector<48x16xf32>, vector<16x128xf32>, vector<48x128xf32> -> vector<48x128xf32>
    %101 = arith.addf %0, %99 : vector<48x128xf32>
    %102 = arith.negf %101 : vector<48x128xf32>
    %103 = math.exp %102 : vector<48x128xf32>
    %cst_42 = arith.constant 1.000000e+00 : f32
    %104 = vector.broadcast %cst_42 : f32 to vector<48x128xf32>
    %105 = arith.addf %104, %103 : vector<48x128xf32>
    %106 = arith.divf %104, %105 : vector<48x128xf32>
    %107 = arith.mulf %101, %106 : vector<48x128xf32>
    %cst_43 = arith.constant dense<0.000000e+00> : vector<48x128xf32>
    %108 = tpu.matmul %107, %4, %cst_43 {dimension_numbers = #tpu.dot_dimension_numbers<[1], [0], [0], [1], [0, 0, 1, 1], [], []>} : vector<48x128xf32>, vector<128x128xf32>, vector<48x128xf32> -> vector<48x128xf32>
    %109 = arith.addf %108, %9 : vector<48x128xf32>
    %110 = arith.negf %109 : vector<48x128xf32>
    %111 = math.exp %110 : vector<48x128xf32>
    %cst_44 = arith.constant 1.000000e+00 : f32
    %112 = vector.broadcast %cst_44 : f32 to vector<48x128xf32>
    %113 = arith.addf %112, %111 : vector<48x128xf32>
    %114 = arith.divf %112, %113 : vector<48x128xf32>
    %115 = arith.mulf %109, %114 : vector<48x128xf32>
    %cst_45 = arith.constant dense<0.000000e+00> : vector<48x128xf32>
    %116 = tpu.matmul %115, %5, %cst_45 {dimension_numbers = #tpu.dot_dimension_numbers<[1], [0], [0], [1], [0, 0, 1, 1], [], []>} : vector<48x128xf32>, vector<128x128xf32>, vector<48x128xf32> -> vector<48x128xf32>
    %117 = arith.addf %116, %12 : vector<48x128xf32>
    %118 = arith.mulf %100, %117 : vector<48x128xf32>
    %cst_46 = arith.constant dense<0.000000e+00> : vector<16x128xf32>
    %119 = tpu.matmul %3, %118, %cst_46 {dimension_numbers = #tpu.dot_dimension_numbers<[1], [0], [0], [1], [0, 0, 1, 1], [], []>} : vector<16x48xf32>, vector<48x128xf32>, vector<16x128xf32> -> vector<16x128xf32>
    %120 = arith.addf %98, %119 : vector<16x128xf32>
    %121 = arith.negf %120 : vector<16x128xf32>
    %122 = math.exp %121 : vector<16x128xf32>
    %cst_47 = arith.constant 1.000000e+00 : f32
    %123 = vector.broadcast %cst_47 : f32 to vector<16x128xf32>
    %124 = arith.addf %123, %122 : vector<16x128xf32>
    %125 = arith.divf %123, %124 : vector<16x128xf32>
    %126 = arith.mulf %120, %125 : vector<16x128xf32>
    %cst_48 = arith.constant dense<0.000000e+00> : vector<16x128xf32>
    %127 = tpu.matmul %126, %6, %cst_48 {dimension_numbers = #tpu.dot_dimension_numbers<[1], [0], [0], [1], [0, 0, 1, 1], [], []>} : vector<16x128xf32>, vector<128x128xf32>, vector<16x128xf32> -> vector<16x128xf32>
    %128 = arith.addf %127, %15 : vector<16x128xf32>
    %129 = arith.addf %79, %128 : vector<16x128xf32>
    %c0_49 = arith.constant 0 : index
    %c0_50 = arith.constant 0 : index
    %130 = vector.load %arg13[%c0_49, %c0_50] : memref<16x128xf32, #tpu.memory_space<vmem>>, vector<16x128xf32>
    tpu.vector_store %arg13[%c0_49, %c0_50], %129 {strides = array<i32>} : memref<16x128xf32, #tpu.memory_space<vmem>>, vector<16x128xf32>,
    return
  }
}

</mosaic_0001>

<llo_original>
// kernel: mpnn_forward.1
$region0: #{mpnn_forward.1}
  #allocation0 [shape = 'u32[]', space=smem, size = 0x4, offset = 0x4, fixed_abs, tag = 'smem constant byte address 0x4 - core index']
  #allocation1 [shape = 'u32[144,128]{1,0:T(1,128)}', space=vmem, size = 0x12000, scoped, tag = 'internal scratch']
  %s0 = inlined_call_operand.vmem [shape: f32[16,128], index: 0, kind: input, shape index: {}, may-alias: {0,13}]
  %s1 = inlined_call_operand.vmem [shape: f32[48,128], index: 1, kind: input, shape index: {}]
  %s2 = inlined_call_operand.vmem [shape: f32[48,16], index: 2, kind: input, shape index: {}]
  %s3 = inlined_call_operand.vmem [shape: f32[48,16], index: 3, kind: input, shape index: {}]
  %s4 = inlined_call_operand.vmem [shape: f32[16,48], index: 4, kind: input, shape index: {}]
  %s5 = inlined_call_operand.vmem [shape: f32[128,128], index: 5, kind: input, shape index: {}]
  %s6 = inlined_call_operand.vmem [shape: f32[1,128], index: 6, kind: input, shape index: {}]
  %s7 = inlined_call_operand.vmem [shape: f32[128,128], index: 7, kind: input, shape index: {}]
  %s8 = inlined_call_operand.vmem [shape: f32[1,128], index: 8, kind: input, shape index: {}]
  %s9 = inlined_call_operand.vmem [shape: f32[128,128], index: 9, kind: input, shape index: {}]
  %s10 = inlined_call_operand.vmem [shape: f32[1,128], index: 10, kind: input, shape index: {}]
  %s11 = inlined_call_operand.vmem [shape: f32[1,128], index: 11, kind: input, shape index: {}]
  %s12 = inlined_call_operand.vmem [shape: f32[1,128], index: 12, kind: input, shape index: {}]
  %s13 = inlined_call_operand.vmem [shape: f32[16,128], index: 13, kind: output, shape index: {}, may-alias: {0,13}]
  %s14 = sld [smem:[#allocation0]]
  $region62: #{mpnn_forward.1} parent=0
    _
  %s16 = ssub.s32 1, %s14
  %s17 = scalar_select 0, %s16, %s14
  // Predicated region
  $region2: #{mpnn_forward.1} parent=0 // pred_check
    _
  $region3: #{mpnn_forward.1} parent=0 // pred_check_branch
    %19 = sbr.rel (0) target = $region5
  $region4: #{mpnn_forward.1} parent=0 // pred_region
    _
  $region5: #{mpnn_forward.1} parent=0 // pred_fallthru
    _
  // Predicated region
  $region6: #{mpnn_forward.1} parent=0 // pred_check
    _
  $region7: #{mpnn_forward.1} parent=0 // pred_check_branch
    %21 = sbr.rel (0) target = $region9
  $region8: #{mpnn_forward.1} parent=0 // pred_region
    _
  $region9: #{mpnn_forward.1} parent=0 // pred_fallthru
    _
  // Predicated region
  $region10: #{mpnn_forward.1} parent=0 // pred_check
    _
  $region11: #{mpnn_forward.1} parent=0 // pred_check_branch
    %23 = sbr.rel (0) target = $region13
  $region12: #{mpnn_forward.1} parent=0 // pred_region
    _
  $region13: #{mpnn_forward.1} parent=0 // pred_fallthru
    _
  // Predicated region
  $region14: #{mpnn_forward.1} parent=0 // pred_check
    _
  $region15: #{mpnn_forward.1} parent=0 // pred_check_branch
    %25 = sbr.rel (0) target = $region17
  $region16: #{mpnn_forward.1} parent=0 // pred_region
    _
  $region17: #{mpnn_forward.1} parent=0 // pred_fallthru
    _
  // Predicated region
  $region18: #{mpnn_forward.1} parent=0 // pred_check
    _
  $region19: #{mpnn_forward.1} parent=0 // pred_check_branch
    %27 = sbr.rel (0) target = $region21
  $region20: #{mpnn_forward.1} parent=0 // pred_region
    _
  $region21: #{mpnn_forward.1} parent=0 // pred_fallthru
    _
  // Predicated region
  $region22: #{mpnn_forward.1} parent=0 // pred_check
    _
  $region23: #{mpnn_forward.1} parent=0 // pred_check_branch
    %29 = sbr.rel (0) target = $region25
  $region24: #{mpnn_forward.1} parent=0 // pred_region
    _
  $region25: #{mpnn_forward.1} parent=0 // pred_fallthru
    _
  // Predicated region
  $region26: #{mpnn_forward.1} parent=0 // pred_check
    _
  $region27: #{mpnn_forward.1} parent=0 // pred_check_branch
    %31 = sbr.rel (0) target = $region29
  $region28: #{mpnn_forward.1} parent=0 // pred_region
    _
  $region29: #{mpnn_forward.1} parent=0 // pred_fallthru
    _
  // Predicated region
  $region30: #{mpnn_forward.1} parent=0 // pred_check
    _
  $region31: #{mpnn_forward.1} parent=0 // pred_check_branch
    %33 = sbr.rel (0) target = $region33
  $region32: #{mpnn_forward.1} parent=0 // pred_region
    _
  $region33: #{mpnn_forward.1} parent=0 // pred_fallthru
    _
  // Predicated region
  $region34: #{mpnn_forward.1} parent=0 // pred_check
    _
  $region35: #{mpnn_forward.1} parent=0 // pred_check_branch
    %35 = sbr.rel (0) target = $region37
  $region36: #{mpnn_forward.1} parent=0 // pred_region
    _
  $region37: #{mpnn_forward.1} parent=0 // pred_fallthru
    _
  // Predicated region
  $region38: #{mpnn_forward.1} parent=0 // pred_check
    _
  $region39: #{mpnn_forward.1} parent=0 // pred_check_branch
    %37 = sbr.rel (0) target = $region41
  $region40: #{mpnn_forward.1} parent=0 // pred_region
    _
  $region41: #{mpnn_forward.1} parent=0 // pred_fallthru
    _
  // Predicated region
  $region42: #{mpnn_forward.1} parent=0 // pred_check
    _
  $region43: #{mpnn_forward.1} parent=0 // pred_check_branch
    %39 = sbr.rel (0) target = $region45
  $region44: #{mpnn_forward.1} parent=0 // pred_region
    _
  $region45: #{mpnn_forward.1} parent=0 // pred_fallthru
    _
  // Predicated region
  $region46: #{mpnn_forward.1} parent=0 // pred_check
    _
  $region47: #{mpnn_forward.1} parent=0 // pred_check_branch
    %41 = sbr.rel (0) target = $region49
  $region48: #{mpnn_forward.1} parent=0 // pred_region
    _
  $region49: #{mpnn_forward.1} parent=0 // pred_fallthru
    _
  // Predicated region
  $region50: #{mpnn_forward.1} parent=0 // pred_check
    _
  $region51: #{mpnn_forward.1} parent=0 // pred_check_branch
    %43 = sbr.rel (0) target = $region53
  $region52: #{mpnn_forward.1} parent=0 // pred_region
    _
  $region53: #{mpnn_forward.1} parent=0 // pred_fallthru
    _
  %v44 = vld [vmem:[%s1] sm:$0xff]
  %v45 = vld [vmem:[%s1 + $0x8] sm:$0xff]
  %v46 = vld [vmem:[%s1 + $0x10] sm:$0xff]
  %v47 = vld [vmem:[%s1 + $0x18] sm:$0xff]
  %v48 = vld [vmem:[%s1 + $0x20] sm:$0xff]
  %v49 = vld [vmem:[%s1 + $0x28] sm:$0xff]
  %v50 = vld [vmem:[%s2] sm:$0xff]
  %v51 = vld [vmem:[%s2 + $0x8] sm:$0xff]
  %v52 = vld [vmem:[%s2 + $0x10] sm:$0xff]
  %v53 = vld [vmem:[%s2 + $0x18] sm:$0xff]
  %v54 = vld [vmem:[%s2 + $0x20] sm:$0xff]
  %v55 = vld [vmem:[%s2 + $0x28] sm:$0xff]
  %v56 = vld [vmem:[%s3] sm:$0xff]
  %v57 = vld [vmem:[%s3 + $0x8] sm:$0xff]
  %v58 = vld [vmem:[%s3 + $0x10] sm:$0xff]
  %v59 = vld [vmem:[%s3 + $0x18] sm:$0xff]
  %v60 = vld [vmem:[%s3 + $0x20] sm:$0xff]
  %v61 = vld [vmem:[%s3 + $0x28] sm:$0xff]
  %v62 = vld [vmem:[%s4] sm:$0xff]
  %v63 = vld [vmem:[%s4 + $0x8] sm:$0xff]
  %v64 = vld [vmem:[%s5] sm:$0xff]
  %v65 = vld [vmem:[%s5 + $0x8] sm:$0xff]
  %v66 = vld [vmem:[%s5 + $0x10] sm:$0xff]
  %v67 = vld [vmem:[%s5 + $0x18] sm:$0xff]
  %v68 = vld [vmem:[%s5 + $0x20] sm:$0xff]
  %v69 = vld [vmem:[%s5 + $0x28] sm:$0xff]
  %v70 = vld [vmem:[%s5 + $0x30] sm:$0xff]
  %v71 = vld [vmem:[%s5 + $0x38] sm:$0xff]
  %v72 = vld [vmem:[%s5 + $0x40] sm:$0xff]
  %v73 = vld [vmem:[%s5 + $0x48] sm:$0xff]
  %v74 = vld [vmem:[%s5 + $0x50] sm:$0xff]
  %v75 = vld [vmem:[%s5 + $0x58] sm:$0xff]
  %v76 = vld [vmem:[%s5 + $0x60] sm:$0xff]
  %v77 = vld [vmem:[%s5 + $0x68] sm:$0xff]
  %v78 = vld [vmem:[%s5 + $0x70] sm:$0xff]
  %v79 = vld [vmem:[%s5 + $0x78] sm:$0xff]
  %v80 = vld [vmem:[%s7] sm:$0xff]
  %v81 = vld [vmem:[%s7 + $0x8] sm:$0xff]
  %v82 = vld [vmem:[%s7 + $0x10] sm:$0xff]
  %v83 = vld [vmem:[%s7 + $0x18] sm:$0xff]
  %v84 = vld [vmem:[%s7 + $0x20] sm:$0xff]
  %v85 = vld [vmem:[%s7 + $0x28] sm:$0xff]
  %v86 = vld [vmem:[%s7 + $0x30] sm:$0xff]
  %v87 = vld [vmem:[%s7 + $0x38] sm:$0xff]
  %v88 = vld [vmem:[%s7 + $0x40] sm:$0xff]
  %v89 = vld [vmem:[%s7 + $0x48] sm:$0xff]
  %v90 = vld [vmem:[%s7 + $0x50] sm:$0xff]
  %v91 = vld [vmem:[%s7 + $0x58] sm:$0xff]
  %v92 = vld [vmem:[%s7 + $0x60] sm:$0xff]
  %v93 = vld [vmem:[%s7 + $0x68] sm:$0xff]
  %v94 = vld [vmem:[%s7 + $0x70] sm:$0xff]
  %v95 = vld [vmem:[%s7 + $0x78] sm:$0xff]
  %v96 = vld [vmem:[%s9] sm:$0xff]
  %v97 = vld [vmem:[%s9 + $0x8] sm:$0xff]
  %v98 = vld [vmem:[%s9 + $0x10] sm:$0xff]
  %v99 = vld [vmem:[%s9 + $0x18] sm:$0xff]
  %v100 = vld [vmem:[%s9 + $0x20] sm:$0xff]
  %v101 = vld [vmem:[%s9 + $0x28] sm:$0xff]
  %v102 = vld [vmem:[%s9 + $0x30] sm:$0xff]
  %v103 = vld [vmem:[%s9 + $0x38] sm:$0xff]
  %v104 = vld [vmem:[%s9 + $0x40] sm:$0xff]
  %v105 = vld [vmem:[%s9 + $0x48] sm:$0xff]
  %v106 = vld [vmem:[%s9 + $0x50] sm:$0xff]
  %v107 = vld [vmem:[%s9 + $0x58] sm:$0xff]
  %v108 = vld [vmem:[%s9 + $0x60] sm:$0xff]
  %v109 = vld [vmem:[%s9 + $0x68] sm:$0xff]
  %v110 = vld [vmem:[%s9 + $0x70] sm:$0xff]
  %v111 = vld [vmem:[%s9 + $0x78] sm:$0xff]
  %v112 = vld [vmem:[%s6] sm:$0x1]
  %v114 = vlaneseq
  %v115 = vshrl.u32 %v114, 7
  %v116 = vsub.s32 0, %v115
  %v117 = vrot.slane %v112, %v116
  %v119 = vld [vmem:[%s8] sm:$0x1]
  %v121 = vlaneseq
  %v122 = vshrl.u32 %v121, 7
  %v123 = vsub.s32 0, %v122
  %v124 = vrot.slane %v119, %v123
  %v126 = vld [vmem:[%s10] sm:$0x1]
  %v128 = vlaneseq
  %v129 = vshrl.u32 %v128, 7
  %v130 = vsub.s32 0, %v129
  %v131 = vrot.slane %v126, %v130
  %v133 = vld [vmem:[%s11] sm:$0x1]
  %v135 = vlaneseq
  %v136 = vshrl.u32 %v135, 7
  %v137 = vsub.s32 0, %v136
  %v138 = vrot.slane %v133, %v137
  %v140 = vld [vmem:[%s12] sm:$0x1]
  %v142 = vlaneseq
  %v143 = vshrl.u32 %v142, 7
  %v144 = vsub.s32 0, %v143
  %v145 = vrot.slane %v140, %v144
  %v147 = vlaneseq
  %v148 = vand.u32 %v147, 127
  %vm149 = vcmp.lt.s32.totalorder %v148, 32
  %v150 = vsel %vm149, 1, 0
  %v151 = vcvt.s32.f32 %v150
  %v152 = vld [vmem:[%s0] sm:$0xff]
  %v153 = vld [vmem:[%s0 + $0x8] sm:$0xff]
  %154 = vadd.xlane.f32.xlu0 %v152
  %v155 = vpop.xlane.xlu0 %154
  %156 = vadd.xlane.f32.xlu0 %v153
  %v157 = vpop.xlane.xlu0 %156
  %v158 = vmul.f32 %v155, 0.03125
  %v159 = vmul.f32 %v157, 0.03125
  %v160 = vsub.f32 %v152, %v158
  %v161 = vsub.f32 %v153, %v159
  %v162 = vmul.f32 %v160, %v151
  %v163 = vmul.f32 %v161, %v151
  %v164 = vmul.f32 %v162, %v162
  %v165 = vmul.f32 %v163, %v163
  %166 = vadd.xlane.f32.xlu0 %v164
  %v167 = vpop.xlane.xlu0 %166
  %168 = vadd.xlane.f32.xlu0 %v165
  %v169 = vpop.xlane.xlu0 %168
  %v170 = vmul.f32 %v167, 0.03125
  %v171 = vmul.f32 %v169, 0.03125
  %v172 = vadd.f32 %v170, 1e-05
  %v173 = vadd.f32 %v171, 1e-05
  %v174 = vrsqrt.pop %v172
  %v175 = vrsqrt.pop %v173
  %v176 = vmul.f32 %v162, %v174
  %v177 = vmul.f32 %v163, %v175
  %v178 = vmul.f32 %v176, %v138
  %v179 = vmul.f32 %v177, %v138
  %v180 = vadd.f32 %v178, %v145
  %v181 = vadd.f32 %v179, %v145
  %vm182 = vcmask 130048
  %v184 = vsel %vm182, %v50, 0
  %v187 = vsel %vm182, %v51, 0
  %v190 = vsel %vm182, %v52, 0
  %v193 = vsel %vm182, %v53, 0
  %v196 = vsel %vm182, %v54, 0
  %v199 = vsel %vm182, %v55, 0
  %201 = vmatprep.subr.mxu0 0.0
  %202 = vmatpush1.msra.mxu0 %v180
  %203 = vmatprep.subr.mxu0 0.0
  %204 = vmatpush1.msra.mxu0 %v181
  %205 = vmatprep.subr.mxu0 0.0
  %206 = vmatpush1.msra.mxu0 0.0
  %207 = vmatprep.subr.mxu0 0.0
  %208 = vmatpush1.msra.mxu0 0.0
  %209 = vmatprep.subr.mxu0 0.0
  %210 = vmatpush1.msra.mxu0 0.0
  %211 = vmatprep.subr.mxu0 0.0
  %212 = vmatpush1.msra.mxu0 0.0
  %213 = vmatprep.subr.mxu0 0.0
  %214 = vmatpush1.msra.mxu0 0.0
  %215 = vmatprep.subr.mxu0 0.0
  %216 = vmatpush1.msra.mxu0 0.0
  %217 = vmatprep.subr.mxu0 0.0
  %218 = vmatpush1.msra.mxu0 0.0
  %219 = vmatprep.subr.mxu0 0.0
  %220 = vmatpush1.msra.mxu0 0.0
  %221 = vmatprep.subr.mxu0 0.0
  %222 = vmatpush1.msra.mxu0 0.0
  %223 = vmatprep.subr.mxu0 0.0
  %224 = vmatpush1.msra.mxu0 0.0
  %225 = vmatprep.subr.mxu0 0.0
  %226 = vmatpush1.msra.mxu0 0.0
  %227 = vmatprep.subr.mxu0 0.0
  %228 = vmatpush1.msra.mxu0 0.0
  %229 = vmatprep.subr.mxu0 0.0
  %230 = vmatpush1.msra.mxu0 0.0
  %231 = vmatprep.subr.mxu0 0.0
  %232 = vmatpush1.msra.mxu0 0.0
  %233 = vmatprep.subr.mxu0 0.0
  %234 = vmatpush1.msra.mxu0 0.0
  %235 = vmatprep.subr.mxu0 0.0
  %236 = vmatpush1.msra.mxu0 0.0
  %237 = vmatprep.subr.mxu0 0.0
  %238 = vmatpush1.msra.mxu0 0.0
  %239 = vmatprep.subr.mxu0 0.0
  %240 = vmatpush1.msra.mxu0 0.0
  %241 = vmatprep.subr.mxu0 0.0
  %242 = vmatpush1.msra.mxu0 0.0
  %243 = vmatprep.subr.mxu0 0.0
  %244 = vmatpush1.msra.mxu0 0.0
  %245 = vmatprep.subr.mxu0 0.0
  %246 = vmatpush1.msra.mxu0 0.0
  %247 = vmatprep.subr.mxu0 0.0
  %248 = vmatpush1.msra.mxu0 0.0
  %249 = vmatprep.subr.mxu0 0.0
  %250 = vmatpush1.msra.mxu0 0.0
  %251 = vmatprep.subr.mxu0 0.0
  %252 = vmatpush1.msra.mxu0 0.0
  %253 = vmatprep.subr.mxu0 0.0
  %254 = vmatpush1.msra.mxu0 0.0
  %255 = vmatprep.subr.mxu0 0.0
  %256 = vmatpush1.msra.mxu0 0.0
  %257 = vmatprep.subr.mxu0 0.0
  %258 = vmatpush1.msra.mxu0 0.0
  %259 = vmatprep.subr.mxu0 0.0
  %260 = vmatpush1.msra.mxu0 0.0
  %261 = vmatprep.subr.mxu0 0.0
  %262 = vmatpush1.msra.mxu0 0.0
  %263 = vmatprep.subr.mxu0 0.0
  %264 = vmatpush1.msra.mxu0 0.0
  %265 = vmatprep.mubr.f32.mxu0 0.0
  %266 = vmatmul.mubr.f32.gmra.mrb[0].mxu0 %v184
  %v267 = vpop.f32.mrb[0].mxu0
  %v268 = vadd.f32 0.0, %v267
  %v269 = vpop.f32.mrb[0].mxu0
  %270 = vmatprep.mubr.f32.mxu0 0.0
  %271 = vmatmul.mubr.f32.gmra.mrb[0].mxu0 %v187
  %v272 = vpop.f32.mrb[0].mxu0
  %v273 = vadd.f32 0.0, %v272
  %v274 = vpop.f32.mrb[0].mxu0
  %275 = vmatprep.mubr.f32.mxu0 0.0
  %276 = vmatmul.mubr.f32.gmra.mrb[0].mxu0 %v190
  %v277 = vpop.f32.mrb[0].mxu0
  %v278 = vadd.f32 0.0, %v277
  %v279 = vpop.f32.mrb[0].mxu0
  %280 = vmatprep.mubr.f32.mxu0 0.0
  %281 = vmatmul.mubr.f32.gmra.mrb[0].mxu0 %v193
  %v282 = vpop.f32.mrb[0].mxu0
  %v283 = vadd.f32 0.0, %v282
  %v284 = vpop.f32.mrb[0].mxu0
  %285 = vmatprep.mubr.f32.mxu0 0.0
  %286 = vmatmul.mubr.f32.gmra.mrb[0].mxu0 %v196
  %v287 = vpop.f32.mrb[0].mxu0
  %v288 = vadd.f32 0.0, %v287
  %v289 = vpop.f32.mrb[0].mxu0
  %290 = vmatprep.mubr.f32.mxu0 0.0
  %291 = vmatmul.mubr.f32.gmra.mrb[0].mxu0 %v199
  %v292 = vpop.f32.mrb[0].mxu0
  %v293 = vadd.f32 0.0, %v292
  %v294 = vpop.f32.mrb[0].mxu0
  %295 = vdwg.mxu0
  %v297 = vsel %vm182, %v56, 0
  %v300 = vsel %vm182, %v57, 0
  %v303 = vsel %vm182, %v58, 0
  %v306 = vsel %vm182, %v59, 0
  %v309 = vsel %vm182, %v60, 0
  %v312 = vsel %vm182, %v61, 0
  %314 = vmatprep.subr.mxu0 0.0
  %315 = vmatpush1.msra.mxu0 %v180
  %316 = vmatprep.subr.mxu0 0.0
  %317 = vmatpush1.msra.mxu0 %v181
  %318 = vmatprep.subr.mxu0 0.0
  %319 = vmatpush1.msra.mxu0 0.0
  %320 = vmatprep.subr.mxu0 0.0
  %321 = vmatpush1.msra.mxu0 0.0
  %322 = vmatprep.subr.mxu0 0.0
  %323 = vmatpush1.msra.mxu0 0.0
  %324 = vmatprep.subr.mxu0 0.0
  %325 = vmatpush1.msra.mxu0 0.0
  %326 = vmatprep.subr.mxu0 0.0
  %327 = vmatpush1.msra.mxu0 0.0
  %328 = vmatprep.subr.mxu0 0.0
  %329 = vmatpush1.msra.mxu0 0.0
  %330 = vmatprep.subr.mxu0 0.0
  %331 = vmatpush1.msra.mxu0 0.0
  %332 = vmatprep.subr.mxu0 0.0
  %333 = vmatpush1.msra.mxu0 0.0
  %334 = vmatprep.subr.mxu0 0.0
  %335 = vmatpush1.msra.mxu0 0.0
  %336 = vmatprep.subr.mxu0 0.0
  %337 = vmatpush1.msra.mxu0 0.0
  %338 = vmatprep.subr.mxu0 0.0
  %339 = vmatpush1.msra.mxu0 0.0
  %340 = vmatprep.subr.mxu0 0.0
  %341 = vmatpush1.msra.mxu0 0.0
  %342 = vmatprep.subr.mxu0 0.0
  %343 = vmatpush1.msra.mxu0 0.0
  %344 = vmatprep.subr.mxu0 0.0
  %345 = vmatpush1.msra.mxu0 0.0
  %346 = vmatprep.subr.mxu0 0.0
  %347 = vmatpush1.msra.mxu0 0.0
  %348 = vmatprep.subr.mxu0 0.0
  %349 = vmatpush1.msra.mxu0 0.0
  %350 = vmatprep.subr.mxu0 0.0
  %351 = vmatpush1.msra.mxu0 0.0
  %352 = vmatprep.subr.mxu0 0.0
  %353 = vmatpush1.msra.mxu0 0.0
  %354 = vmatprep.subr.mxu0 0.0
  %355 = vmatpush1.msra.mxu0 0.0
  %356 = vmatprep.subr.mxu0 0.0
  %357 = vmatpush1.msra.mxu0 0.0
  %358 = vmatprep.subr.mxu0 0.0
  %359 = vmatpush1.msra.mxu0 0.0
  %360 = vmatprep.subr.mxu0 0.0
  %361 = vmatpush1.msra.mxu0 0.0
  %362 = vmatprep.subr.mxu0 0.0
  %363 = vmatpush1.msra.mxu0 0.0
  %364 = vmatprep.subr.mxu0 0.0
  %365 = vmatpush1.msra.mxu0 0.0
  %366 = vmatprep.subr.mxu0 0.0
  %367 = vmatpush1.msra.mxu0 0.0
  %368 = vmatprep.subr.mxu0 0.0
  %369 = vmatpush1.msra.mxu0 0.0
  %370 = vmatprep.subr.mxu0 0.0
  %371 = vmatpush1.msra.mxu0 0.0
  %372 = vmatprep.subr.mxu0 0.0
  %373 = vmatpush1.msra.mxu0 0.0
  %374 = vmatprep.subr.mxu0 0.0
  %375 = vmatpush1.msra.mxu0 0.0
  %376 = vmatprep.subr.mxu0 0.0
  %377 = vmatpush1.msra.mxu0 0.0
  %378 = vmatprep.mubr.f32.mxu0 0.0
  %379 = vmatmul.mubr.f32.gmra.mrb[0].mxu0 %v297
  %v380 = vpop.f32.mrb[0].mxu0
  %v381 = vadd.f32 0.0, %v380
  %v382 = vpop.f32.mrb[0].mxu0
  %383 = vmatprep.mubr.f32.mxu0 0.0
  %384 = vmatmul.mubr.f32.gmra.mrb[0].mxu0 %v300
  %v385 = vpop.f32.mrb[0].mxu0
  %v386 = vadd.f32 0.0, %v385
  %v387 = vpop.f32.mrb[0].mxu0
  %388 = vmatprep.mubr.f32.mxu0 0.0
  %389 = vmatmul.mubr.f32.gmra.mrb[0].mxu0 %v303
  %v390 = vpop.f32.mrb[0].mxu0
  %v391 = vadd.f32 0.0, %v390
  %v392 = vpop.f32.mrb[0].mxu0
  %393 = vmatprep.mubr.f32.mxu0 0.0
  %394 = vmatmul.mubr.f32.gmra.mrb[0].mxu0 %v306
  %v395 = vpop.f32.mrb[0].mxu0
  %v396 = vadd.f32 0.0, %v395
  %v397 = vpop.f32.mrb[0].mxu0
  %398 = vmatprep.mubr.f32.mxu0 0.0
  %399 = vmatmul.mubr.f32.gmra.mrb[0].mxu0 %v309
  %v400 = vpop.f32.mrb[0].mxu0
  %v401 = vadd.f32 0.0, %v400
  %v402 = vpop.f32.mrb[0].mxu0
  %403 = vmatprep.mubr.f32.mxu0 0.0
  %404 = vmatmul.mubr.f32.gmra.mrb[0].mxu0 %v312
  %v405 = vpop.f32.mrb[0].mxu0
  %v406 = vadd.f32 0.0, %v405
  %v407 = vpop.f32.mrb[0].mxu0
  %408 = vdwg.mxu0
  %v409 = vadd.f32 %v44, %v268
  %v410 = vadd.f32 %v45, %v273
  %v411 = vadd.f32 %v46, %v278
  %v412 = vadd.f32 %v47, %v283
  %v413 = vadd.f32 %v48, %v288
  %v414 = vadd.f32 %v49, %v293
  %v415 = vxor.u32 %v409, 2147483648
  %v416 = vxor.u32 %v410, 2147483648
  %v417 = vxor.u32 %v411, 2147483648
  %v418 = vxor.u32 %v412, 2147483648
  %v419 = vxor.u32 %v413, 2147483648
  %v420 = vxor.u32 %v414, 2147483648
  %v421 = vmul.f32 %v415, 1.442695
  %v422 = vpow.pop %v421
  %v423 = vmul.f32 %v416, 1.442695
  %v424 = vpow.pop %v423
  %v425 = vmul.f32 %v417, 1.442695
  %v426 = vpow.pop %v425
  %v427 = vmul.f32 %v418, 1.442695
  %v428 = vpow.pop %v427
  %v429 = vmul.f32 %v419, 1.442695
  %v430 = vpow.pop %v429
  %v431 = vmul.f32 %v420, 1.442695
  %v432 = vpow.pop %v431
  %v433 = vadd.f32 %v422, 1.0
  %v434 = vadd.f32 %v424, 1.0
  %v435 = vadd.f32 %v426, 1.0
  %v436 = vadd.f32 %v428, 1.0
  %v437 = vadd.f32 %v430, 1.0
  %v438 = vadd.f32 %v432, 1.0
  %v439 = vrcp.pop %v433
  %v440 = vmul.f32 1.0, %v439
  %v441 = vrcp.pop %v434
  %v442 = vmul.f32 1.0, %v441
  %v443 = vrcp.pop %v435
  %v444 = vmul.f32 1.0, %v443
  %v445 = vrcp.pop %v436
  %v446 = vmul.f32 1.0, %v445
  %v447 = vrcp.pop %v437
  %v448 = vmul.f32 1.0, %v447
  %v449 = vrcp.pop %v438
  %v450 = vmul.f32 1.0, %v449
  %v451 = vmul.f32 %v409, %v440
  %v452 = vmul.f32 %v410, %v442
  %v453 = vmul.f32 %v411, %v444
  %v454 = vmul.f32 %v412, %v446
  %v455 = vmul.f32 %v413, %v448
  %v456 = vmul.f32 %v414, %v450
  %457 = vmatprep.subr.mxu0 0.0
  %458 = vmatpush1.msra.mxu0 %v64
  %459 = vmatprep.subr.mxu0 0.0
  %460 = vmatpush1.msra.mxu0 %v65
  %461 = vmatprep.subr.mxu0 0.0
  %462 = vmatpush1.msra.mxu0 %v66
  %463 = vmatprep.subr.mxu0 0.0
  %464 = vmatpush1.msra.mxu0 %v67
  %465 = vmatprep.subr.mxu0 0.0
  %466 = vmatpush1.msra.mxu0 %v68
  %467 = vmatprep.subr.mxu0 0.0
  %468 = vmatpush1.msra.mxu0 %v69
  %469 = vmatprep.subr.mxu0 0.0
  %470 = vmatpush1.msra.mxu0 %v70
  %471 = vmatprep.subr.mxu0 0.0
  %472 = vmatpush1.msra.mxu0 %v71
  %473 = vmatprep.subr.mxu0 0.0
  %474 = vmatpush1.msra.mxu0 %v72
  %475 = vmatprep.subr.mxu0 0.0
  %476 = vmatpush1.msra.mxu0 %v73
  %477 = vmatprep.subr.mxu0 0.0
  %478 = vmatpush1.msra.mxu0 %v74
  %479 = vmatprep.subr.mxu0 0.0
  %480 = vmatpush1.msra.mxu0 %v75
  %481 = vmatprep.subr.mxu0 0.0
  %482 = vmatpush1.msra.mxu0 %v76
  %483 = vmatprep.subr.mxu0 0.0
  %484 = vmatpush1.msra.mxu0 %v77
  %485 = vmatprep.subr.mxu0 0.0
  %486 = vmatpush1.msra.mxu0 %v78
  %487 = vmatprep.subr.mxu0 0.0
  %488 = vmatpush1.msra.mxu0 %v79
  %489 = vmatprep.subr.mxu0 0.0
  %490 = vmatpush1.msra.mxu0 0.0
  %491 = vmatprep.subr.mxu0 0.0
  %492 = vmatpush1.msra.mxu0 0.0
  %493 = vmatprep.subr.mxu0 0.0
  %494 = vmatpush1.msra.mxu0 0.0
  %495 = vmatprep.subr.mxu0 0.0
  %496 = vmatpush1.msra.mxu0 0.0
  %497 = vmatprep.subr.mxu0 0.0
  %498 = vmatpush1.msra.mxu0 0.0
  %499 = vmatprep.subr.mxu0 0.0
  %500 = vmatpush1.msra.mxu0 0.0
  %501 = vmatprep.subr.mxu0 0.0
  %502 = vmatpush1.msra.mxu0 0.0
  %503 = vmatprep.subr.mxu0 0.0
  %504 = vmatpush1.msra.mxu0 0.0
  %505 = vmatprep.subr.mxu0 0.0
  %506 = vmatpush1.msra.mxu0 0.0
  %507 = vmatprep.subr.mxu0 0.0
  %508 = vmatpush1.msra.mxu0 0.0
  %509 = vmatprep.subr.mxu0 0.0
  %510 = vmatpush1.msra.mxu0 0.0
  %511 = vmatprep.subr.mxu0 0.0
  %512 = vmatpush1.msra.mxu0 0.0
  %513 = vmatprep.subr.mxu0 0.0
  %514 = vmatpush1.msra.mxu0 0.0
  %515 = vmatprep.subr.mxu0 0.0
  %516 = vmatpush1.msra.mxu0 0.0
  %517 = vmatprep.subr.mxu0 0.0
  %518 = vmatpush1.msra.mxu0 0.0
  %519 = vmatprep.subr.mxu0 0.0
  %520 = vmatpush1.msra.mxu0 0.0
  %521 = vmatprep.mubr.f32.mxu0 0.0
  %522 = vmatmul.mubr.f32.gmra.mrb[0].mxu0 %v451
  %v523 = vpop.f32.mrb[0].mxu0
  %v524 = vadd.f32 %v117, %v523
  %v525 = vpop.f32.mrb[0].mxu0
  %526 = vmatprep.mubr.f32.mxu0 0.0
  %527 = vmatmul.mubr.f32.gmra.mrb[0].mxu0 %v452
  %v528 = vpop.f32.mrb[0].mxu0
  %v529 = vadd.f32 %v117, %v528
  %v530 = vpop.f32.mrb[0].mxu0
  %531 = vmatprep.mubr.f32.mxu0 0.0
  %532 = vmatmul.mubr.f32.gmra.mrb[0].mxu0 %v453
  %v533 = vpop.f32.mrb[0].mxu0
  %v534 = vadd.f32 %v117, %v533
  %v535 = vpop.f32.mrb[0].mxu0
  %536 = vmatprep.mubr.f32.mxu0 0.0
  %537 = vmatmul.mubr.f32.gmra.mrb[0].mxu0 %v454
  %v538 = vpop.f32.mrb[0].mxu0
  %v539 = vadd.f32 %v117, %v538
  %v540 = vpop.f32.mrb[0].mxu0
  %541 = vmatprep.mubr.f32.mxu0 0.0
  %542 = vmatmul.mubr.f32.gmra.mrb[0].mxu0 %v455
  %v543 = vpop.f32.mrb[0].mxu0
  %v544 = vadd.f32 %v117, %v543
  %v545 = vpop.f32.mrb[0].mxu0
  %546 = vmatprep.mubr.f32.mxu0 0.0
  %547 = vmatmul.mubr.f32.gmra.mrb[0].mxu0 %v456
  %v548 = vpop.f32.mrb[0].mxu0
  %v549 = vadd.f32 %v117, %v548
  %v550 = vpop.f32.mrb[0].mxu0
  %551 = vdwg.mxu0
  %v552 = vxor.u32 %v524, 2147483648
  %v553 = vxor.u32 %v529, 2147483648
  %v554 = vxor.u32 %v534, 2147483648
  %v555 = vxor.u32 %v539, 2147483648
  %v556 = vxor.u32 %v544, 2147483648
  %v557 = vxor.u32 %v549, 2147483648
  %v558 = vmul.f32 %v552, 1.442695
  %v559 = vpow.pop %v558
  %v560 = vmul.f32 %v553, 1.442695
  %v561 = vpow.pop %v560
  %v562 = vmul.f32 %v554, 1.442695
  %v563 = vpow.pop %v562
  %v564 = vmul.f32 %v555, 1.442695
  %v565 = vpow.pop %v564
  %v566 = vmul.f32 %v556, 1.442695
  %v567 = vpow.pop %v566
  %v568 = vmul.f32 %v557, 1.442695
  %v569 = vpow.pop %v568
  %v570 = vadd.f32 %v559, 1.0
  %v571 = vadd.f32 %v561, 1.0
  %v572 = vadd.f32 %v563, 1.0
  %v573 = vadd.f32 %v565, 1.0
  %v574 = vadd.f32 %v567, 1.0
  %v575 = vadd.f32 %v569, 1.0
  %v576 = vrcp.pop %v570
  %v577 = vmul.f32 1.0, %v576
  %v578 = vrcp.pop %v571
  %v579 = vmul.f32 1.0, %v578
  %v580 = vrcp.pop %v572
  %v581 = vmul.f32 1.0, %v580
  %v582 = vrcp.pop %v573
  %v583 = vmul.f32 1.0, %v582
  %v584 = vrcp.pop %v574
  %v585 = vmul.f32 1.0, %v584
  %v586 = vrcp.pop %v575
  %v587 = vmul.f32 1.0, %v586
  %v588 = vmul.f32 %v524, %v577
  %v589 = vmul.f32 %v529, %v579
  %v590 = vmul.f32 %v534, %v581
  %v591 = vmul.f32 %v539, %v583
  %v592 = vmul.f32 %v544, %v585
  %v593 = vmul.f32 %v549, %v587
  %594 = vmatprep.subr.mxu0 0.0
  %595 = vmatpush1.msra.mxu0 %v80
  %596 = vmatprep.subr.mxu0 0.0
  %597 = vmatpush1.msra.mxu0 %v81
  %598 = vmatprep.subr.mxu0 0.0
  %599 = vmatpush1.msra.mxu0 %v82
  %600 = vmatprep.subr.mxu0 0.0
  %601 = vmatpush1.msra.mxu0 %v83
  %602 = vmatprep.subr.mxu0 0.0
  %603 = vmatpush1.msra.mxu0 %v84
  %604 = vmatprep.subr.mxu0 0.0
  %605 = vmatpush1.msra.mxu0 %v85
  %606 = vmatprep.subr.mxu0 0.0
  %607 = vmatpush1.msra.mxu0 %v86
  %608 = vmatprep.subr.mxu0 0.0
  %609 = vmatpush1.msra.mxu0 %v87
  %610 = vmatprep.subr.mxu0 0.0
  %611 = vmatpush1.msra.mxu0 %v88
  %612 = vmatprep.subr.mxu0 0.0
  %613 = vmatpush1.msra.mxu0 %v89
  %614 = vmatprep.subr.mxu0 0.0
  %615 = vmatpush1.msra.mxu0 %v90
  %616 = vmatprep.subr.mxu0 0.0
  %617 = vmatpush1.msra.mxu0 %v91
  %618 = vmatprep.subr.mxu0 0.0
  %619 = vmatpush1.msra.mxu0 %v92
  %620 = vmatprep.subr.mxu0 0.0
  %621 = vmatpush1.msra.mxu0 %v93
  %622 = vmatprep.subr.mxu0 0.0
  %623 = vmatpush1.msra.mxu0 %v94
  %624 = vmatprep.subr.mxu0 0.0
  %625 = vmatpush1.msra.mxu0 %v95
  %626 = vmatprep.subr.mxu0 0.0
  %627 = vmatpush1.msra.mxu0 0.0
  %628 = vmatprep.subr.mxu0 0.0
  %629 = vmatpush1.msra.mxu0 0.0
  %630 = vmatprep.subr.mxu0 0.0
  %631 = vmatpush1.msra.mxu0 0.0
  %632 = vmatprep.subr.mxu0 0.0
  %633 = vmatpush1.msra.mxu0 0.0
  %634 = vmatprep.subr.mxu0 0.0
  %635 = vmatpush1.msra.mxu0 0.0
  %636 = vmatprep.subr.mxu0 0.0
  %637 = vmatpush1.msra.mxu0 0.0
  %638 = vmatprep.subr.mxu0 0.0
  %639 = vmatpush1.msra.mxu0 0.0
  %640 = vmatprep.subr.mxu0 0.0
  %641 = vmatpush1.msra.mxu0 0.0
  %642 = vmatprep.subr.mxu0 0.0
  %643 = vmatpush1.msra.mxu0 0.0
  %644 = vmatprep.subr.mxu0 0.0
  %645 = vmatpush1.msra.mxu0 0.0
  %646 = vmatprep.subr.mxu0 0.0
  %647 = vmatpush1.msra.mxu0 0.0
  %648 = vmatprep.subr.mxu0 0.0
  %649 = vmatpush1.msra.mxu0 0.0
  %650 = vmatprep.subr.mxu0 0.0
  %651 = vmatpush1.msra.mxu0 0.0
  %652 = vmatprep.subr.mxu0 0.0
  %653 = vmatpush1.msra.mxu0 0.0
  %654 = vmatprep.subr.mxu0 0.0
  %655 = vmatpush1.msra.mxu0 0.0
  %656 = vmatprep.subr.mxu0 0.0
  %657 = vmatpush1.msra.mxu0 0.0
  %658 = vmatprep.mubr.f32.mxu0 0.0
  %659 = vmatmul.mubr.f32.gmra.mrb[0].mxu0 %v588
  %v660 = vpop.f32.mrb[0].mxu0
  %v661 = vadd.f32 %v124, %v660
  %v662 = vpop.f32.mrb[0].mxu0
  %663 = vmatprep.mubr.f32.mxu0 0.0
  %664 = vmatmul.mubr.f32.gmra.mrb[0].mxu0 %v589
  %v665 = vpop.f32.mrb[0].mxu0
  %v666 = vadd.f32 %v124, %v665
  %v667 = vpop.f32.mrb[0].mxu0
  %668 = vmatprep.mubr.f32.mxu0 0.0
  %669 = vmatmul.mubr.f32.gmra.mrb[0].mxu0 %v590
  %v670 = vpop.f32.mrb[0].mxu0
  %v671 = vadd.f32 %v124, %v670
  %v672 = vpop.f32.mrb[0].mxu0
  %673 = vmatprep.mubr.f32.mxu0 0.0
  %674 = vmatmul.mubr.f32.gmra.mrb[0].mxu0 %v591
  %v675 = vpop.f32.mrb[0].mxu0
  %v676 = vadd.f32 %v124, %v675
  %v677 = vpop.f32.mrb[0].mxu0
  %678 = vmatprep.mubr.f32.mxu0 0.0
  %679 = vmatmul.mubr.f32.gmra.mrb[0].mxu0 %v592
  %v680 = vpop.f32.mrb[0].mxu0
  %v681 = vadd.f32 %v124, %v680
  %v682 = vpop.f32.mrb[0].mxu0
  %683 = vmatprep.mubr.f32.mxu0 0.0
  %684 = vmatmul.mubr.f32.gmra.mrb[0].mxu0 %v593
  %v685 = vpop.f32.mrb[0].mxu0
  %v686 = vadd.f32 %v124, %v685
  %v687 = vpop.f32.mrb[0].mxu0
  %688 = vdwg.mxu0
  %v689 = vmul.f32 %v381, %v661
  %v690 = vmul.f32 %v386, %v666
  %v691 = vmul.f32 %v391, %v671
  %v692 = vmul.f32 %v396, %v676
  %v693 = vmul.f32 %v401, %v681
  %v694 = vmul.f32 %v406, %v686
  %vm695 = vcmask 392192
  %v697 = vsel %vm695, %v62, 0
  %v700 = vsel %vm695, %v63, 0
  %702 = vmatprep.subr.mxu0 0.0
  %703 = vmatpush1.msra.mxu0 %v689
  %704 = vmatprep.subr.mxu0 0.0
  %705 = vmatpush1.msra.mxu0 %v690
  %706 = vmatprep.subr.mxu0 0.0
  %707 = vmatpush1.msra.mxu0 %v691
  %708 = vmatprep.subr.mxu0 0.0
  %709 = vmatpush1.msra.mxu0 %v692
  %710 = vmatprep.subr.mxu0 0.0
  %711 = vmatpush1.msra.mxu0 %v693
  %712 = vmatprep.subr.mxu0 0.0
  %713 = vmatpush1.msra.mxu0 %v694
  %714 = vmatprep.subr.mxu0 0.0
  %715 = vmatpush1.msra.mxu0 0.0
  %716 = vmatprep.subr.mxu0 0.0
  %717 = vmatpush1.msra.mxu0 0.0
  %718 = vmatprep.subr.mxu0 0.0
  %719 = vmatpush1.msra.mxu0 0.0
  %720 = vmatprep.subr.mxu0 0.0
  %721 = vmatpush1.msra.mxu0 0.0
  %722 = vmatprep.subr.mxu0 0.0
  %723 = vmatpush1.msra.mxu0 0.0
  %724 = vmatprep.subr.mxu0 0.0
  %725 = vmatpush1.msra.mxu0 0.0
  %726 = vmatprep.subr.mxu0 0.0
  %727 = vmatpush1.msra.mxu0 0.0
  %728 = vmatprep.subr.mxu0 0.0
  %729 = vmatpush1.msra.mxu0 0.0
  %730 = vmatprep.subr.mxu0 0.0
  %731 = vmatpush1.msra.mxu0 0.0
  %732 = vmatprep.subr.mxu0 0.0
  %733 = vmatpush1.msra.mxu0 0.0
  %734 = vmatprep.subr.mxu0 0.0
  %735 = vmatpush1.msra.mxu0 0.0
  %736 = vmatprep.subr.mxu0 0.0
  %737 = vmatpush1.msra.mxu0 0.0
  %738 = vmatprep.subr.mxu0 0.0
  %739 = vmatpush1.msra.mxu0 0.0
  %740 = vmatprep.subr.mxu0 0.0
  %741 = vmatpush1.msra.mxu0 0.0
  %742 = vmatprep.subr.mxu0 0.0
  %743 = vmatpush1.msra.mxu0 0.0
  %744 = vmatprep.subr.mxu0 0.0
  %745 = vmatpush1.msra.mxu0 0.0
  %746 = vmatprep.subr.mxu0 0.0
  %747 = vmatpush1.msra.mxu0 0.0
  %748 = vmatprep.subr.mxu0 0.0
  %749 = vmatpush1.msra.mxu0 0.0
  %750 = vmatprep.subr.mxu0 0.0
  %751 = vmatpush1.msra.mxu0 0.0
  %752 = vmatprep.subr.mxu0 0.0
  %753 = vmatpush1.msra.mxu0 0.0
  %754 = vmatprep.subr.mxu0 0.0
  %755 = vmatpush1.msra.mxu0 0.0
  %756 = vmatprep.subr.mxu0 0.0
  %757 = vmatpush1.msra.mxu0 0.0
  %758 = vmatprep.subr.mxu0 0.0
  %759 = vmatpush1.msra.mxu0 0.0
  %760 = vmatprep.subr.mxu0 0.0
  %761 = vmatpush1.msra.mxu0 0.0
  %762 = vmatprep.subr.mxu0 0.0
  %763 = vmatpush1.msra.mxu0 0.0
  %764 = vmatprep.subr.mxu0 0.0
  %765 = vmatpush1.msra.mxu0 0.0
  %766 = vmatprep.mubr.f32.mxu0 0.0
  %767 = vmatmul.mubr.f32.gmra.mrb[0].mxu0 %v697
  %v768 = vpop.f32.mrb[0].mxu0
  %v769 = vadd.f32 0.0, %v768
  %v770 = vpop.f32.mrb[0].mxu0
  %771 = vmatprep.mubr.f32.mxu0 0.0
  %772 = vmatmul.mubr.f32.gmra.mrb[0].mxu0 %v700
  %v773 = vpop.f32.mrb[0].mxu0
  %v774 = vadd.f32 0.0, %v773
  %v775 = vpop.f32.mrb[0].mxu0
  %776 = vdwg.mxu0
  %v777 = vadd.f32 %v180, %v769
  %v778 = vadd.f32 %v181, %v774
  %v779 = vxor.u32 %v777, 2147483648
  %v780 = vxor.u32 %v778, 2147483648
  %v781 = vmul.f32 %v779, 1.442695
  %v782 = vpow.pop %v781
  %v783 = vmul.f32 %v780, 1.442695
  %v784 = vpow.pop %v783
  %v785 = vadd.f32 %v782, 1.0
  %v786 = vadd.f32 %v784, 1.0
  %v787 = vrcp.pop %v785
  %v788 = vmul.f32 1.0, %v787
  %v789 = vrcp.pop %v786
  %v790 = vmul.f32 1.0, %v789
  %v791 = vmul.f32 %v777, %v788
  %v792 = vmul.f32 %v778, %v790
  %793 = vmatprep.subr.mxu0 0.0
  %794 = vmatpush1.msra.mxu0 %v96
  %795 = vmatprep.subr.mxu0 0.0
  %796 = vmatpush1.msra.mxu0 %v97
  %797 = vmatprep.subr.mxu0 0.0
  %798 = vmatpush1.msra.mxu0 %v98
  %799 = vmatprep.subr.mxu0 0.0
  %800 = vmatpush1.msra.mxu0 %v99
  %801 = vmatprep.subr.mxu0 0.0
  %802 = vmatpush1.msra.mxu0 %v100
  %803 = vmatprep.subr.mxu0 0.0
  %804 = vmatpush1.msra.mxu0 %v101
  %805 = vmatprep.subr.mxu0 0.0
  %806 = vmatpush1.msra.mxu0 %v102
  %807 = vmatprep.subr.mxu0 0.0
  %808 = vmatpush1.msra.mxu0 %v103
  %809 = vmatprep.subr.mxu0 0.0
  %810 = vmatpush1.msra.mxu0 %v104
  %811 = vmatprep.subr.mxu0 0.0
  %812 = vmatpush1.msra.mxu0 %v105
  %813 = vmatprep.subr.mxu0 0.0
  %814 = vmatpush1.msra.mxu0 %v106
  %815 = vmatprep.subr.mxu0 0.0
  %816 = vmatpush1.msra.mxu0 %v107
  %817 = vmatprep.subr.mxu0 0.0
  %818 = vmatpush1.msra.mxu0 %v108
  %819 = vmatprep.subr.mxu0 0.0
  %820 = vmatpush1.msra.mxu0 %v109
  %821 = vmatprep.subr.mxu0 0.0
  %822 = vmatpush1.msra.mxu0 %v110
  %823 = vmatprep.subr.mxu0 0.0
  %824 = vmatpush1.msra.mxu0 %v111
  %825 = vmatprep.subr.mxu0 0.0
  %826 = vmatpush1.msra.mxu0 0.0
  %827 = vmatprep.subr.mxu0 0.0
  %828 = vmatpush1.msra.mxu0 0.0
  %829 = vmatprep.subr.mxu0 0.0
  %830 = vmatpush1.msra.mxu0 0.0
  %831 = vmatprep.subr.mxu0 0.0
  %832 = vmatpush1.msra.mxu0 0.0
  %833 = vmatprep.subr.mxu0 0.0
  %834 = vmatpush1.msra.mxu0 0.0
  %835 = vmatprep.subr.mxu0 0.0
  %836 = vmatpush1.msra.mxu0 0.0
  %837 = vmatprep.subr.mxu0 0.0
  %838 = vmatpush1.msra.mxu0 0.0
  %839 = vmatprep.subr.mxu0 0.0
  %840 = vmatpush1.msra.mxu0 0.0
  %841 = vmatprep.subr.mxu0 0.0
  %842 = vmatpush1.msra.mxu0 0.0
  %843 = vmatprep.subr.mxu0 0.0
  %844 = vmatpush1.msra.mxu0 0.0
  %845 = vmatprep.subr.mxu0 0.0
  %846 = vmatpush1.msra.mxu0 0.0
  %847 = vmatprep.subr.mxu0 0.0
  %848 = vmatpush1.msra.mxu0 0.0
  %849 = vmatprep.subr.mxu0 0.0
  %850 = vmatpush1.msra.mxu0 0.0
  %851 = vmatprep.subr.mxu0 0.0
  %852 = vmatpush1.msra.mxu0 0.0
  %853 = vmatprep.subr.mxu0 0.0
  %854 = vmatpush1.msra.mxu0 0.0
  %855 = vmatprep.subr.mxu0 0.0
  %856 = vmatpush1.msra.mxu0 0.0
  %857 = vmatprep.mubr.f32.mxu0 0.0
  %858 = vmatmul.mubr.f32.gmra.mrb[0].mxu0 %v791
  %v859 = vpop.f32.mrb[0].mxu0
  %v860 = vadd.f32 %v131, %v859
  %v861 = vpop.f32.mrb[0].mxu0
  %862 = vmatprep.mubr.f32.mxu0 0.0
  %863 = vmatmul.mubr.f32.gmra.mrb[0].mxu0 %v792
  %v864 = vpop.f32.mrb[0].mxu0
  %v865 = vadd.f32 %v131, %v864
  %v866 = vpop.f32.mrb[0].mxu0
  %867 = vdwg.mxu0
  %v868 = vadd.f32 %v152, %v860
  %v869 = vadd.f32 %v153, %v865
  %870 = vadd.xlane.f32.xlu0 %v868
  %v871 = vpop.xlane.xlu0 %870
  %872 = vadd.xlane.f32.xlu0 %v869
  %v873 = vpop.xlane.xlu0 %872
  %v874 = vmul.f32 %v871, 0.03125
  %v875 = vmul.f32 %v873, 0.03125
  %v876 = vsub.f32 %v868, %v874
  %v877 = vsub.f32 %v869, %v875
  %v878 = vmul.f32 %v876, %v151
  %v879 = vmul.f32 %v877, %v151
  %v880 = vmul.f32 %v878, %v878
  %v881 = vmul.f32 %v879, %v879
  %882 = vadd.xlane.f32.xlu0 %v880
  %v883 = vpop.xlane.xlu0 %882
  %884 = vadd.xlane.f32.xlu0 %v881
  %v885 = vpop.xlane.xlu0 %884
  %v886 = vmul.f32 %v883, 0.03125
  %v887 = vmul.f32 %v885, 0.03125
  %v888 = vadd.f32 %v886, 1e-05
  %v889 = vadd.f32 %v887, 1e-05
  %v890 = vrsqrt.pop %v888
  %v891 = vrsqrt.pop %v889
  %v892 = vmul.f32 %v878, %v890
  %v893 = vmul.f32 %v879, %v891
  %v894 = vmul.f32 %v892, %v138
  %v895 = vmul.f32 %v893, %v138
  %v896 = vadd.f32 %v894, %v145
  %v897 = vadd.f32 %v895, %v145
  %898 = vmatprep.subr.mxu0 0.0
  %899 = vmatpush1.msra.mxu0 %v896
  %900 = vmatprep.subr.mxu0 0.0
  %901 = vmatpush1.msra.mxu0 %v897
  %902 = vmatprep.subr.mxu0 0.0
  %903 = vmatpush1.msra.mxu0 0.0
  %904 = vmatprep.subr.mxu0 0.0
  %905 = vmatpush1.msra.mxu0 0.0
  %906 = vmatprep.subr.mxu0 0.0
  %907 = vmatpush1.msra.mxu0 0.0
  %908 = vmatprep.subr.mxu0 0.0
  %909 = vmatpush1.msra.mxu0 0.0
  %910 = vmatprep.subr.mxu0 0.0
  %911 = vmatpush1.msra.mxu0 0.0
  %912 = vmatprep.subr.mxu0 0.0
  %913 = vmatpush1.msra.mxu0 0.0
  %914 = vmatprep.subr.mxu0 0.0
  %915 = vmatpush1.msra.mxu0 0.0
  %916 = vmatprep.subr.mxu0 0.0
  %917 = vmatpush1.msra.mxu0 0.0
  %918 = vmatprep.subr.mxu0 0.0
  %919 = vmatpush1.msra.mxu0 0.0
  %920 = vmatprep.subr.mxu0 0.0
  %921 = vmatpush1.msra.mxu0 0.0
  %922 = vmatprep.subr.mxu0 0.0
  %923 = vmatpush1.msra.mxu0 0.0
  %924 = vmatprep.subr.mxu0 0.0
  %925 = vmatpush1.msra.mxu0 0.0
  %926 = vmatprep.subr.mxu0 0.0
  %927 = vmatpush1.msra.mxu0 0.0
  %928 = vmatprep.subr.mxu0 0.0
  %929 = vmatpush1.msra.mxu0 0.0
  %930 = vmatprep.subr.mxu0 0.0
  %931 = vmatpush1.msra.mxu0 0.0
  %932 = vmatprep.subr.mxu0 0.0
  %933 = vmatpush1.msra.mxu0 0.0
  %934 = vmatprep.subr.mxu0 0.0
  %935 = vmatpush1.msra.mxu0 0.0
  %936 = vmatprep.subr.mxu0 0.0
  %937 = vmatpush1.msra.mxu0 0.0
  %938 = vmatprep.subr.mxu0 0.0
  %939 = vmatpush1.msra.mxu0 0.0
  %940 = vmatprep.subr.mxu0 0.0
  %941 = vmatpush1.msra.mxu0 0.0
  %942 = vmatprep.subr.mxu0 0.0
  %943 = vmatpush1.msra.mxu0 0.0
  %944 = vmatprep.subr.mxu0 0.0
  %945 = vmatpush1.msra.mxu0 0.0
  %946 = vmatprep.subr.mxu0 0.0
  %947 = vmatpush1.msra.mxu0 0.0
  %948 = vmatprep.subr.mxu0 0.0
  %949 = vmatpush1.msra.mxu0 0.0
  %950 = vmatprep.subr.mxu0 0.0
  %951 = vmatpush1.msra.mxu0 0.0
  %952 = vmatprep.subr.mxu0 0.0
  %953 = vmatpush1.msra.mxu0 0.0
  %954 = vmatprep.subr.mxu0 0.0
  %955 = vmatpush1.msra.mxu0 0.0
  %956 = vmatprep.subr.mxu0 0.0
  %957 = vmatpush1.msra.mxu0 0.0
  %958 = vmatprep.subr.mxu0 0.0
  %959 = vmatpush1.msra.mxu0 0.0
  %960 = vmatprep.subr.mxu0 0.0
  %961 = vmatpush1.msra.mxu0 0.0
  %962 = vmatprep.mubr.f32.mxu0 0.0
  %963 = vmatmul.mubr.f32.gmra.mrb[0].mxu0 %v184
  %v964 = vpop.f32.mrb[0].mxu0
  %v965 = vadd.f32 0.0, %v964
  %v966 = vpop.f32.mrb[0].mxu0
  %967 = vmatprep.mubr.f32.mxu0 0.0
  %968 = vmatmul.mubr.f32.gmra.mrb[0].mxu0 %v187
  %v969 = vpop.f32.mrb[0].mxu0
  %v970 = vadd.f32 0.0, %v969
  %v971 = vpop.f32.mrb[0].mxu0
  %972 = vmatprep.mubr.f32.mxu0 0.0
  %973 = vmatmul.mubr.f32.gmra.mrb[0].mxu0 %v190
  %v974 = vpop.f32.mrb[0].mxu0
  %v975 = vadd.f32 0.0, %v974
  %v976 = vpop.f32.mrb[0].mxu0
  %977 = vmatprep.mubr.f32.mxu0 0.0
  %978 = vmatmul.mubr.f32.gmra.mrb[0].mxu0 %v193
  %v979 = vpop.f32.mrb[0].mxu0
  %v980 = vadd.f32 0.0, %v979
  %v981 = vpop.f32.mrb[0].mxu0
  %982 = vmatprep.mubr.f32.mxu0 0.0
  %983 = vmatmul.mubr.f32.gmra.mrb[0].mxu0 %v196
  %v984 = vpop.f32.mrb[0].mxu0
  %v985 = vadd.f32 0.0, %v984
  %v986 = vpop.f32.mrb[0].mxu0
  %987 = vmatprep.mubr.f32.mxu0 0.0
  %988 = vmatmul.mubr.f32.gmra.mrb[0].mxu0 %v199
  %v989 = vpop.f32.mrb[0].mxu0
  %v990 = vadd.f32 0.0, %v989
  %v991 = vpop.f32.mrb[0].mxu0
  %992 = vdwg.mxu0
  %993 = vmatprep.subr.mxu0 0.0
  %994 = vmatpush1.msra.mxu0 %v896
  %995 = vmatprep.subr.mxu0 0.0
  %996 = vmatpush1.msra.mxu0 %v897
  %997 = vmatprep.subr.mxu0 0.0
  %998 = vmatpush1.msra.mxu0 0.0
  %999 = vmatprep.subr.mxu0 0.0
  %1000 = vmatpush1.msra.mxu0 0.0
  %1001 = vmatprep.subr.mxu0 0.0
  %1002 = vmatpush1.msra.mxu0 0.0
  %1003 = vmatprep.subr.mxu0 0.0
  %1004 = vmatpush1.msra.mxu0 0.0
  %1005 = vmatprep.subr.mxu0 0.0
  %1006 = vmatpush1.msra.mxu0 0.0
  %1007 = vmatprep.subr.mxu0 0.0
  %1008 = vmatpush1.msra.mxu0 0.0
  %1009 = vmatprep.subr.mxu0 0.0
  %1010 = vmatpush1.msra.mxu0 0.0
  %1011 = vmatprep.subr.mxu0 0.0
  %1012 = vmatpush1.msra.mxu0 0.0
  %1013 = vmatprep.subr.mxu0 0.0
  %1014 = vmatpush1.msra.mxu0 0.0
  %1015 = vmatprep.subr.mxu0 0.0
  %1016 = vmatpush1.msra.mxu0 0.0
  %1017 = vmatprep.subr.mxu0 0.0
  %1018 = vmatpush1.msra.mxu0 0.0
  %1019 = vmatprep.subr.mxu0 0.0
  %1020 = vmatpush1.msra.mxu0 0.0
  %1021 = vmatprep.subr.mxu0 0.0
  %1022 = vmatpush1.msra.mxu0 0.0
  %1023 = vmatprep.subr.mxu0 0.0
  %1024 = vmatpush1.msra.mxu0 0.0
  %1025 = vmatprep.subr.mxu0 0.0
  %1026 = vmatpush1.msra.mxu0 0.0
  %1027 = vmatprep.subr.mxu0 0.0
  %1028 = vmatpush1.msra.mxu0 0.0
  %1029 = vmatprep.subr.mxu0 0.0
  %1030 = vmatpush1.msra.mxu0 0.0
  %1031 = vmatprep.subr.mxu0 0.0
  %1032 = vmatpush1.msra.mxu0 0.0
  %1033 = vmatprep.subr.mxu0 0.0
  %1034 = vmatpush1.msra.mxu0 0.0
  %1035 = vmatprep.subr.mxu0 0.0
  %1036 = vmatpush1.msra.mxu0 0.0
  %1037 = vmatprep.subr.mxu0 0.0
  %1038 = vmatpush1.msra.mxu0 0.0
  %1039 = vmatprep.subr.mxu0 0.0
  %1040 = vmatpush1.msra.mxu0 0.0
  %1041 = vmatprep.subr.mxu0 0.0
  %1042 = vmatpush1.msra.mxu0 0.0
  %1043 = vmatprep.subr.mxu0 0.0
  %1044 = vmatpush1.msra.mxu0 0.0
  %1045 = vmatprep.subr.mxu0 0.0
  %1046 = vmatpush1.msra.mxu0 0.0
  %1047 = vmatprep.subr.mxu0 0.0
  %1048 = vmatpush1.msra.mxu0 0.0
  %1049 = vmatprep.subr.mxu0 0.0
  %1050 = vmatpush1.msra.mxu0 0.0
  %1051 = vmatprep.subr.mxu0 0.0
  %1052 = vmatpush1.msra.mxu0 0.0
  %1053 = vmatprep.subr.mxu0 0.0
  %1054 = vmatpush1.msra.mxu0 0.0
  %1055 = vmatprep.subr.mxu0 0.0
  %1056 = vmatpush1.msra.mxu0 0.0
  %1057 = vmatprep.mubr.f32.mxu0 0.0
  %1058 = vmatmul.mubr.f32.gmra.mrb[0].mxu0 %v297
  %v1059 = vpop.f32.mrb[0].mxu0
  %v1060 = vadd.f32 0.0, %v1059
  %v1061 = vpop.f32.mrb[0].mxu0
  %1062 = vmatprep.mubr.f32.mxu0 0.0
  %1063 = vmatmul.mubr.f32.gmra.mrb[0].mxu0 %v300
  %v1064 = vpop.f32.mrb[0].mxu0
  %v1065 = vadd.f32 0.0, %v1064
  %v1066 = vpop.f32.mrb[0].mxu0
  %1067 = vmatprep.mubr.f32.mxu0 0.0
  %1068 = vmatmul.mubr.f32.gmra.mrb[0].mxu0 %v303
  %v1069 = vpop.f32.mrb[0].mxu0
  %v1070 = vadd.f32 0.0, %v1069
  %v1071 = vpop.f32.mrb[0].mxu0
  %1072 = vmatprep.mubr.f32.mxu0 0.0
  %1073 = vmatmul.mubr.f32.gmra.mrb[0].mxu0 %v306
  %v1074 = vpop.f32.mrb[0].mxu0
  %v1075 = vadd.f32 0.0, %v1074
  %v1076 = vpop.f32.mrb[0].mxu0
  %1077 = vmatprep.mubr.f32.mxu0 0.0
  %1078 = vmatmul.mubr.f32.gmra.mrb[0].mxu0 %v309
  %v1079 = vpop.f32.mrb[0].mxu0
  %v1080 = vadd.f32 0.0, %v1079
  %v1081 = vpop.f32.mrb[0].mxu0
  %1082 = vmatprep.mubr.f32.mxu0 0.0
  %1083 = vmatmul.mubr.f32.gmra.mrb[0].mxu0 %v312
  %v1084 = vpop.f32.mrb[0].mxu0
  %v1085 = vadd.f32 0.0, %v1084
  %v1086 = vpop.f32.mrb[0].mxu0
  %1087 = vdwg.mxu0
  %v1088 = vadd.f32 %v44, %v965
  %v1089 = vadd.f32 %v45, %v970
  %v1090 = vadd.f32 %v46, %v975
  %v1091 = vadd.f32 %v47, %v980
  %v1092 = vadd.f32 %v48, %v985
  %v1093 = vadd.f32 %v49, %v990
  %v1094 = vxor.u32 %v1088, 2147483648
  %v1095 = vxor.u32 %v1089, 2147483648
  %v1096 = vxor.u32 %v1090, 2147483648
  %v1097 = vxor.u32 %v1091, 2147483648
  %v1098 = vxor.u32 %v1092, 2147483648
  %v1099 = vxor.u32 %v1093, 2147483648
  %v1100 = vmul.f32 %v1094, 1.442695
  %v1101 = vpow.pop %v1100
  %v1102 = vmul.f32 %v1095, 1.442695
  %v1103 = vpow.pop %v1102
  %v1104 = vmul.f32 %v1096, 1.442695
  %v1105 = vpow.pop %v1104
  %v1106 = vmul.f32 %v1097, 1.442695
  %v1107 = vpow.pop %v1106
  %v1108 = vmul.f32 %v1098, 1.442695
  %v1109 = vpow.pop %v1108
  %v1110 = vmul.f32 %v1099, 1.442695
  %v1111 = vpow.pop %v1110
  %v1112 = vadd.f32 %v1101, 1.0
  %v1113 = vadd.f32 %v1103, 1.0
  %v1114 = vadd.f32 %v1105, 1.0
  %v1115 = vadd.f32 %v1107, 1.0
  %v1116 = vadd.f32 %v1109, 1.0
  %v1117 = vadd.f32 %v1111, 1.0
  %v1118 = vrcp.pop %v1112
  %v1119 = vmul.f32 1.0, %v1118
  %v1120 = vrcp.pop %v1113
  %v1121 = vmul.f32 1.0, %v1120
  %v1122 = vrcp.pop %v1114
  %v1123 = vmul.f32 1.0, %v1122
  %v1124 = vrcp.pop %v1115
  %v1125 = vmul.f32 1.0, %v1124
  %v1126 = vrcp.pop %v1116
  %v1127 = vmul.f32 1.0, %v1126
  %v1128 = vrcp.pop %v1117
  %v1129 = vmul.f32 1.0, %v1128
  %v1130 = vmul.f32 %v1088, %v1119
  %v1131 = vmul.f32 %v1089, %v1121
  %v1132 = vmul.f32 %v1090, %v1123
  %v1133 = vmul.f32 %v1091, %v1125
  %v1134 = vmul.f32 %v1092, %v1127
  %v1135 = vmul.f32 %v1093, %v1129
  %1136 = vmatprep.subr.mxu0 0.0
  %1137 = vmatpush1.msra.mxu0 %v64
  %1138 = vmatprep.subr.mxu0 0.0
  %1139 = vmatpush1.msra.mxu0 %v65
  %1140 = vmatprep.subr.mxu0 0.0
  %1141 = vmatpush1.msra.mxu0 %v66
  %1142 = vmatprep.subr.mxu0 0.0
  %1143 = vmatpush1.msra.mxu0 %v67
  %1144 = vmatprep.subr.mxu0 0.0
  %1145 = vmatpush1.msra.mxu0 %v68
  %1146 = vmatprep.subr.mxu0 0.0
  %1147 = vmatpush1.msra.mxu0 %v69
  %1148 = vmatprep.subr.mxu0 0.0
  %1149 = vmatpush1.msra.mxu0 %v70
  %1150 = vmatprep.subr.mxu0 0.0
  %1151 = vmatpush1.msra.mxu0 %v71
  %1152 = vmatprep.subr.mxu0 0.0
  %1153 = vmatpush1.msra.mxu0 %v72
  %1154 = vmatprep.subr.mxu0 0.0
  %1155 = vmatpush1.msra.mxu0 %v73
  %1156 = vmatprep.subr.mxu0 0.0
  %1157 = vmatpush1.msra.mxu0 %v74
  %1158 = vmatprep.subr.mxu0 0.0
  %1159 = vmatpush1.msra.mxu0 %v75
  %1160 = vmatprep.subr.mxu0 0.0
  %1161 = vmatpush1.msra.mxu0 %v76
  %1162 = vmatprep.subr.mxu0 0.0
  %1163 = vmatpush1.msra.mxu0 %v77
  %1164 = vmatprep.subr.mxu0 0.0
  %1165 = vmatpush1.msra.mxu0 %v78
  %1166 = vmatprep.subr.mxu0 0.0
  %1167 = vmatpush1.msra.mxu0 %v79
  %1168 = vmatprep.subr.mxu0 0.0
  %1169 = vmatpush1.msra.mxu0 0.0
  %1170 = vmatprep.subr.mxu0 0.0
  %1171 = vmatpush1.msra.mxu0 0.0
  %1172 = vmatprep.subr.mxu0 0.0
  %1173 = vmatpush1.msra.mxu0 0.0
  %1174 = vmatprep.subr.mxu0 0.0
  %1175 = vmatpush1.msra.mxu0 0.0
  %1176 = vmatprep.subr.mxu0 0.0
  %1177 = vmatpush1.msra.mxu0 0.0
  %1178 = vmatprep.subr.mxu0 0.0
  %1179 = vmatpush1.msra.mxu0 0.0
  %1180 = vmatprep.subr.mxu0 0.0
  %1181 = vmatpush1.msra.mxu0 0.0
  %1182 = vmatprep.subr.mxu0 0.0
  %1183 = vmatpush1.msra.mxu0 0.0
  %1184 = vmatprep.subr.mxu0 0.0
  %1185 = vmatpush1.msra.mxu0 0.0
  %1186 = vmatprep.subr.mxu0 0.0
  %1187 = vmatpush1.msra.mxu0 0.0
  %1188 = vmatprep.subr.mxu0 0.0
  %1189 = vmatpush1.msra.mxu0 0.0
  %1190 = vmatprep.subr.mxu0 0.0
  %1191 = vmatpush1.msra.mxu0 0.0
  %1192 = vmatprep.subr.mxu0 0.0
  %1193 = vmatpush1.msra.mxu0 0.0
  %1194 = vmatprep.subr.mxu0 0.0
  %1195 = vmatpush1.msra.mxu0 0.0
  %1196 = vmatprep.subr.mxu0 0.0
  %1197 = vmatpush1.msra.mxu0 0.0
  %1198 = vmatprep.subr.mxu0 0.0
  %1199 = vmatpush1.msra.mxu0 0.0
  %1200 = vmatprep.mubr.f32.mxu0 0.0
  %1201 = vmatmul.mubr.f32.gmra.mrb[0].mxu0 %v1130
  %v1202 = vpop.f32.mrb[0].mxu0
  %v1203 = vadd.f32 %v117, %v1202
  %v1204 = vpop.f32.mrb[0].mxu0
  %1205 = vmatprep.mubr.f32.mxu0 0.0
  %1206 = vmatmul.mubr.f32.gmra.mrb[0].mxu0 %v1131
  %v1207 = vpop.f32.mrb[0].mxu0
  %v1208 = vadd.f32 %v117, %v1207
  %v1209 = vpop.f32.mrb[0].mxu0
  %1210 = vmatprep.mubr.f32.mxu0 0.0
  %1211 = vmatmul.mubr.f32.gmra.mrb[0].mxu0 %v1132
  %v1212 = vpop.f32.mrb[0].mxu0
  %v1213 = vadd.f32 %v117, %v1212
  %v1214 = vpop.f32.mrb[0].mxu0
  %1215 = vmatprep.mubr.f32.mxu0 0.0
  %1216 = vmatmul.mubr.f32.gmra.mrb[0].mxu0 %v1133
  %v1217 = vpop.f32.mrb[0].mxu0
  %v1218 = vadd.f32 %v117, %v1217
  %v1219 = vpop.f32.mrb[0].mxu0
  %1220 = vmatprep.mubr.f32.mxu0 0.0
  %1221 = vmatmul.mubr.f32.gmra.mrb[0].mxu0 %v1134
  %v1222 = vpop.f32.mrb[0].mxu0
  %v1223 = vadd.f32 %v117, %v1222
  %v1224 = vpop.f32.mrb[0].mxu0
  %1225 = vmatprep.mubr.f32.mxu0 0.0
  %1226 = vmatmul.mubr.f32.gmra.mrb[0].mxu0 %v1135
  %v1227 = vpop.f32.mrb[0].mxu0
  %v1228 = vadd.f32 %v117, %v1227
  %v1229 = vpop.f32.mrb[0].mxu0
  %1230 = vdwg.mxu0
  %v1231 = vxor.u32 %v1203, 2147483648
  %v1232 = vxor.u32 %v1208, 2147483648
  %v1233 = vxor.u32 %v1213, 2147483648
  %v1234 = vxor.u32 %v1218, 2147483648
  %v1235 = vxor.u32 %v1223, 2147483648
  %v1236 = vxor.u32 %v1228, 2147483648
  %v1237 = vmul.f32 %v1231, 1.442695
  %v1238 = vpow.pop %v1237
  %v1239 = vmul.f32 %v1232, 1.442695
  %v1240 = vpow.pop %v1239
  %v1241 = vmul.f32 %v1233, 1.442695
  %v1242 = vpow.pop %v1241
  %v1243 = vmul.f32 %v1234, 1.442695
  %v1244 = vpow.pop %v1243
  %v1245 = vmul.f32 %v1235, 1.442695
  %v1246 = vpow.pop %v1245
  %v1247 = vmul.f32 %v1236, 1.442695
  %v1248 = vpow.pop %v1247
  %v1249 = vadd.f32 %v1238, 1.0
  %v1250 = vadd.f32 %v1240, 1.0
  %v1251 = vadd.f32 %v1242, 1.0
  %v1252 = vadd.f32 %v1244, 1.0
  %v1253 = vadd.f32 %v1246, 1.0
  %v1254 = vadd.f32 %v1248, 1.0
  %v1255 = vrcp.pop %v1249
  %v1256 = vmul.f32 1.0, %v1255
  %v1257 = vrcp.pop %v1250
  %v1258 = vmul.f32 1.0, %v1257
  %v1259 = vrcp.pop %v1251
  %v1260 = vmul.f32 1.0, %v1259
  %v1261 = vrcp.pop %v1252
  %v1262 = vmul.f32 1.0, %v1261
  %v1263 = vrcp.pop %v1253
  %v1264 = vmul.f32 1.0, %v1263
  %v1265 = vrcp.pop %v1254
  %v1266 = vmul.f32 1.0, %v1265
  %v1267 = vmul.f32 %v1203, %v1256
  %v1268 = vmul.f32 %v1208, %v1258
  %v1269 = vmul.f32 %v1213, %v1260
  %v1270 = vmul.f32 %v1218, %v1262
  %v1271 = vmul.f32 %v1223, %v1264
  %v1272 = vmul.f32 %v1228, %v1266
  %1273 = vmatprep.subr.mxu0 0.0
  %1274 = vmatpush1.msra.mxu0 %v80
  %1275 = vmatprep.subr.mxu0 0.0
  %1276 = vmatpush1.msra.mxu0 %v81
  %1277 = vmatprep.subr.mxu0 0.0
  %1278 = vmatpush1.msra.mxu0 %v82
  %1279 = vmatprep.subr.mxu0 0.0
  %1280 = vmatpush1.msra.mxu0 %v83
  %1281 = vmatprep.subr.mxu0 0.0
  %1282 = vmatpush1.msra.mxu0 %v84
  %1283 = vmatprep.subr.mxu0 0.0
  %1284 = vmatpush1.msra.mxu0 %v85
  %1285 = vmatprep.subr.mxu0 0.0
  %1286 = vmatpush1.msra.mxu0 %v86
  %1287 = vmatprep.subr.mxu0 0.0
  %1288 = vmatpush1.msra.mxu0 %v87
  %1289 = vmatprep.subr.mxu0 0.0
  %1290 = vmatpush1.msra.mxu0 %v88
  %1291 = vmatprep.subr.mxu0 0.0
  %1292 = vmatpush1.msra.mxu0 %v89
  %1293 = vmatprep.subr.mxu0 0.0
  %1294 = vmatpush1.msra.mxu0 %v90
  %1295 = vmatprep.subr.mxu0 0.0
  %1296 = vmatpush1.msra.mxu0 %v91
  %1297 = vmatprep.subr.mxu0 0.0
  %1298 = vmatpush1.msra.mxu0 %v92
  %1299 = vmatprep.subr.mxu0 0.0
  %1300 = vmatpush1.msra.mxu0 %v93
  %1301 = vmatprep.subr.mxu0 0.0
  %1302 = vmatpush1.msra.mxu0 %v94
  %1303 = vmatprep.subr.mxu0 0.0
  %1304 = vmatpush1.msra.mxu0 %v95
  %1305 = vmatprep.subr.mxu0 0.0
  %1306 = vmatpush1.msra.mxu0 0.0
  %1307 = vmatprep.subr.mxu0 0.0
  %1308 = vmatpush1.msra.mxu0 0.0
  %1309 = vmatprep.subr.mxu0 0.0
  %1310 = vmatpush1.msra.mxu0 0.0
  %1311 = vmatprep.subr.mxu0 0.0
  %1312 = vmatpush1.msra.mxu0 0.0
  %1313 = vmatprep.subr.mxu0 0.0
  %1314 = vmatpush1.msra.mxu0 0.0
  %1315 = vmatprep.subr.mxu0 0.0
  %1316 = vmatpush1.msra.mxu0 0.0
  %1317 = vmatprep.subr.mxu0 0.0
  %1318 = vmatpush1.msra.mxu0 0.0
  %1319 = vmatprep.subr.mxu0 0.0
  %1320 = vmatpush1.msra.mxu0 0.0
  %1321 = vmatprep.subr.mxu0 0.0
  %1322 = vmatpush1.msra.mxu0 0.0
  %1323 = vmatprep.subr.mxu0 0.0
  %1324 = vmatpush1.msra.mxu0 0.0
  %1325 = vmatprep.subr.mxu0 0.0
  %1326 = vmatpush1.msra.mxu0 0.0
  %1327 = vmatprep.subr.mxu0 0.0
  %1328 = vmatpush1.msra.mxu0 0.0
  %1329 = vmatprep.subr.mxu0 0.0
  %1330 = vmatpush1.msra.mxu0 0.0
  %1331 = vmatprep.subr.mxu0 0.0
  %1332 = vmatpush1.msra.mxu0 0.0
  %1333 = vmatprep.subr.mxu0 0.0
  %1334 = vmatpush1.msra.mxu0 0.0
  %1335 = vmatprep.subr.mxu0 0.0
  %1336 = vmatpush1.msra.mxu0 0.0
  %1337 = vmatprep.mubr.f32.mxu0 0.0
  %1338 = vmatmul.mubr.f32.gmra.mrb[0].mxu0 %v1267
  %v1339 = vpop.f32.mrb[0].mxu0
  %v1340 = vadd.f32 %v124, %v1339
  %v1341 = vpop.f32.mrb[0].mxu0
  %1342 = vmatprep.mubr.f32.mxu0 0.0
  %1343 = vmatmul.mubr.f32.gmra.mrb[0].mxu0 %v1268
  %v1344 = vpop.f32.mrb[0].mxu0
  %v1345 = vadd.f32 %v124, %v1344
  %v1346 = vpop.f32.mrb[0].mxu0
  %1347 = vmatprep.mubr.f32.mxu0 0.0
  %1348 = vmatmul.mubr.f32.gmra.mrb[0].mxu0 %v1269
  %v1349 = vpop.f32.mrb[0].mxu0
  %v1350 = vadd.f32 %v124, %v1349
  %v1351 = vpop.f32.mrb[0].mxu0
  %1352 = vmatprep.mubr.f32.mxu0 0.0
  %1353 = vmatmul.mubr.f32.gmra.mrb[0].mxu0 %v1270
  %v1354 = vpop.f32.mrb[0].mxu0
  %v1355 = vadd.f32 %v124, %v1354
  %v1356 = vpop.f32.mrb[0].mxu0
  %1357 = vmatprep.mubr.f32.mxu0 0.0
  %1358 = vmatmul.mubr.f32.gmra.mrb[0].mxu0 %v1271
  %v1359 = vpop.f32.mrb[0].mxu0
  %v1360 = vadd.f32 %v124, %v1359
  %v1361 = vpop.f32.mrb[0].mxu0
  %1362 = vmatprep.mubr.f32.mxu0 0.0
  %1363 = vmatmul.mubr.f32.gmra.mrb[0].mxu0 %v1272
  %v1364 = vpop.f32.mrb[0].mxu0
  %v1365 = vadd.f32 %v124, %v1364
  %v1366 = vpop.f32.mrb[0].mxu0
  %1367 = vdwg.mxu0
  %v1368 = vmul.f32 %v1060, %v1340
  %v1369 = vmul.f32 %v1065, %v1345
  %v1370 = vmul.f32 %v1070, %v1350
  %v1371 = vmul.f32 %v1075, %v1355
  %v1372 = vmul.f32 %v1080, %v1360
  %v1373 = vmul.f32 %v1085, %v1365
  %1374 = vmatprep.subr.mxu0 0.0
  %1375 = vmatpush1.msra.mxu0 %v1368
  %1376 = vmatprep.subr.mxu0 0.0
  %1377 = vmatpush1.msra.mxu0 %v1369
  %1378 = vmatprep.subr.mxu0 0.0
  %1379 = vmatpush1.msra.mxu0 %v1370
  %1380 = vmatprep.subr.mxu0 0.0
  %1381 = vmatpush1.msra.mxu0 %v1371
  %1382 = vmatprep.subr.mxu0 0.0
  %1383 = vmatpush1.msra.mxu0 %v1372
  %1384 = vmatprep.subr.mxu0 0.0
  %1385 = vmatpush1.msra.mxu0 %v1373
  %1386 = vmatprep.subr.mxu0 0.0
  %1387 = vmatpush1.msra.mxu0 0.0
  %1388 = vmatprep.subr.mxu0 0.0
  %1389 = vmatpush1.msra.mxu0 0.0
  %1390 = vmatprep.subr.mxu0 0.0
  %1391 = vmatpush1.msra.mxu0 0.0
  %1392 = vmatprep.subr.mxu0 0.0
  %1393 = vmatpush1.msra.mxu0 0.0
  %1394 = vmatprep.subr.mxu0 0.0
  %1395 = vmatpush1.msra.mxu0 0.0
  %1396 = vmatprep.subr.mxu0 0.0
  %1397 = vmatpush1.msra.mxu0 0.0
  %1398 = vmatprep.subr.mxu0 0.0
  %1399 = vmatpush1.msra.mxu0 0.0
  %1400 = vmatprep.subr.mxu0 0.0
  %1401 = vmatpush1.msra.mxu0 0.0
  %1402 = vmatprep.subr.mxu0 0.0
  %1403 = vmatpush1.msra.mxu0 0.0
  %1404 = vmatprep.subr.mxu0 0.0
  %1405 = vmatpush1.msra.mxu0 0.0
  %1406 = vmatprep.subr.mxu0 0.0
  %1407 = vmatpush1.msra.mxu0 0.0
  %1408 = vmatprep.subr.mxu0 0.0
  %1409 = vmatpush1.msra.mxu0 0.0
  %1410 = vmatprep.subr.mxu0 0.0
  %1411 = vmatpush1.msra.mxu0 0.0
  %1412 = vmatprep.subr.mxu0 0.0
  %1413 = vmatpush1.msra.mxu0 0.0
  %1414 = vmatprep.subr.mxu0 0.0
  %1415 = vmatpush1.msra.mxu0 0.0
  %1416 = vmatprep.subr.mxu0 0.0
  %1417 = vmatpush1.msra.mxu0 0.0
  %1418 = vmatprep.subr.mxu0 0.0
  %1419 = vmatpush1.msra.mxu0 0.0
  %1420 = vmatprep.subr.mxu0 0.0
  %1421 = vmatpush1.msra.mxu0 0.0
  %1422 = vmatprep.subr.mxu0 0.0
  %1423 = vmatpush1.msra.mxu0 0.0
  %1424 = vmatprep.subr.mxu0 0.0
  %1425 = vmatpush1.msra.mxu0 0.0
  %1426 = vmatprep.subr.mxu0 0.0
  %1427 = vmatpush1.msra.mxu0 0.0
  %1428 = vmatprep.subr.mxu0 0.0
  %1429 = vmatpush1.msra.mxu0 0.0
  %1430 = vmatprep.subr.mxu0 0.0
  %1431 = vmatpush1.msra.mxu0 0.0
  %1432 = vmatprep.subr.mxu0 0.0
  %1433 = vmatpush1.msra.mxu0 0.0
  %1434 = vmatprep.subr.mxu0 0.0
  %1435 = vmatpush1.msra.mxu0 0.0
  %1436 = vmatprep.subr.mxu0 0.0
  %1437 = vmatpush1.msra.mxu0 0.0
  %1438 = vmatprep.mubr.f32.mxu0 0.0
  %1439 = vmatmul.mubr.f32.gmra.mrb[0].mxu0 %v697
  %v1440 = vpop.f32.mrb[0].mxu0
  %v1441 = vadd.f32 0.0, %v1440
  %v1442 = vpop.f32.mrb[0].mxu0
  %1443 = vmatprep.mubr.f32.mxu0 0.0
  %1444 = vmatmul.mubr.f32.gmra.mrb[0].mxu0 %v700
  %v1445 = vpop.f32.mrb[0].mxu0
  %v1446 = vadd.f32 0.0, %v1445
  %v1447 = vpop.f32.mrb[0].mxu0
  %1448 = vdwg.mxu0
  %v1449 = vadd.f32 %v896, %v1441
  %v1450 = vadd.f32 %v897, %v1446
  %v1451 = vxor.u32 %v1449, 2147483648
  %v1452 = vxor.u32 %v1450, 2147483648
  %v1453 = vmul.f32 %v1451, 1.442695
  %v1454 = vpow.pop %v1453
  %v1455 = vmul.f32 %v1452, 1.442695
  %v1456 = vpow.pop %v1455
  %v1457 = vadd.f32 %v1454, 1.0
  %v1458 = vadd.f32 %v1456, 1.0
  %v1459 = vrcp.pop %v1457
  %v1460 = vmul.f32 1.0, %v1459
  %v1461 = vrcp.pop %v1458
  %v1462 = vmul.f32 1.0, %v1461
  %v1463 = vmul.f32 %v1449, %v1460
  %v1464 = vmul.f32 %v1450, %v1462
  %1465 = vmatprep.subr.mxu0 0.0
  %1466 = vmatpush1.msra.mxu0 %v96
  %1467 = vmatprep.subr.mxu0 0.0
  %1468 = vmatpush1.msra.mxu0 %v97
  %1469 = vmatprep.subr.mxu0 0.0
  %1470 = vmatpush1.msra.mxu0 %v98
  %1471 = vmatprep.subr.mxu0 0.0
  %1472 = vmatpush1.msra.mxu0 %v99
  %1473 = vmatprep.subr.mxu0 0.0
  %1474 = vmatpush1.msra.mxu0 %v100
  %1475 = vmatprep.subr.mxu0 0.0
  %1476 = vmatpush1.msra.mxu0 %v101
  %1477 = vmatprep.subr.mxu0 0.0
  %1478 = vmatpush1.msra.mxu0 %v102
  %1479 = vmatprep.subr.mxu0 0.0
  %1480 = vmatpush1.msra.mxu0 %v103
  %1481 = vmatprep.subr.mxu0 0.0
  %1482 = vmatpush1.msra.mxu0 %v104
  %1483 = vmatprep.subr.mxu0 0.0
  %1484 = vmatpush1.msra.mxu0 %v105
  %1485 = vmatprep.subr.mxu0 0.0
  %1486 = vmatpush1.msra.mxu0 %v106
  %1487 = vmatprep.subr.mxu0 0.0
  %1488 = vmatpush1.msra.mxu0 %v107
  %1489 = vmatprep.subr.mxu0 0.0
  %1490 = vmatpush1.msra.mxu0 %v108
  %1491 = vmatprep.subr.mxu0 0.0
  %1492 = vmatpush1.msra.mxu0 %v109
  %1493 = vmatprep.subr.mxu0 0.0
  %1494 = vmatpush1.msra.mxu0 %v110
  %1495 = vmatprep.subr.mxu0 0.0
  %1496 = vmatpush1.msra.mxu0 %v111
  %1497 = vmatprep.subr.mxu0 0.0
  %1498 = vmatpush1.msra.mxu0 0.0
  %1499 = vmatprep.subr.mxu0 0.0
  %1500 = vmatpush1.msra.mxu0 0.0
  %1501 = vmatprep.subr.mxu0 0.0
  %1502 = vmatpush1.msra.mxu0 0.0
  %1503 = vmatprep.subr.mxu0 0.0
  %1504 = vmatpush1.msra.mxu0 0.0
  %1505 = vmatprep.subr.mxu0 0.0
  %1506 = vmatpush1.msra.mxu0 0.0
  %1507 = vmatprep.subr.mxu0 0.0
  %1508 = vmatpush1.msra.mxu0 0.0
  %1509 = vmatprep.subr.mxu0 0.0
  %1510 = vmatpush1.msra.mxu0 0.0
  %1511 = vmatprep.subr.mxu0 0.0
  %1512 = vmatpush1.msra.mxu0 0.0
  %1513 = vmatprep.subr.mxu0 0.0
  %1514 = vmatpush1.msra.mxu0 0.0
  %1515 = vmatprep.subr.mxu0 0.0
  %1516 = vmatpush1.msra.mxu0 0.0
  %1517 = vmatprep.subr.mxu0 0.0
  %1518 = vmatpush1.msra.mxu0 0.0
  %1519 = vmatprep.subr.mxu0 0.0
  %1520 = vmatpush1.msra.mxu0 0.0
  %1521 = vmatprep.subr.mxu0 0.0
  %1522 = vmatpush1.msra.mxu0 0.0
  %1523 = vmatprep.subr.mxu0 0.0
  %1524 = vmatpush1.msra.mxu0 0.0
  %1525 = vmatprep.subr.mxu0 0.0
  %1526 = vmatpush1.msra.mxu0 0.0
  %1527 = vmatprep.subr.mxu0 0.0
  %1528 = vmatpush1.msra.mxu0 0.0
  %1529 = vmatprep.mubr.f32.mxu0 0.0
  %1530 = vmatmul.mubr.f32.gmra.mrb[0].mxu0 %v1463
  %v1531 = vpop.f32.mrb[0].mxu0
  %v1532 = vadd.f32 %v131, %v1531
  %v1533 = vpop.f32.mrb[0].mxu0
  %1534 = vmatprep.mubr.f32.mxu0 0.0
  %1535 = vmatmul.mubr.f32.gmra.mrb[0].mxu0 %v1464
  %v1536 = vpop.f32.mrb[0].mxu0
  %v1537 = vadd.f32 %v131, %v1536
  %v1538 = vpop.f32.mrb[0].mxu0
  %1539 = vdwg.mxu0
  %v1540 = vadd.f32 %v868, %v1532
  %v1541 = vadd.f32 %v869, %v1537
  %1542 = vst [vmem:[%s13] sm:$0xff] %v1540
  %1543 = vst [vmem:[%s13 + $0x8] sm:$0xff] %v1541
  // Predicated region
  $region54: #{mpnn_forward.1} parent=0 // pred_check
    _
  $region55: #{mpnn_forward.1} parent=0 // pred_check_branch
    %1545 = sbr.rel (0) target = $region57
  $region56: #{mpnn_forward.1} parent=0 // pred_region
    _
  $region57: #{mpnn_forward.1} parent=0 // pred_fallthru
    _
  // Predicated region
  $region58: #{mpnn_forward.1} parent=0 // pred_check
    _
  $region59: #{mpnn_forward.1} parent=0 // pred_check_branch
    %1547 = sbr.rel (0) target = $region61
  $region60: #{mpnn_forward.1} parent=0 // pred_region
    _
  $region61: #{mpnn_forward.1} parent=0 // pred_fallthru
    _

</llo_original>
